<compile_context>
chip_gen: v5e
topology: v5e:2x2
jax: 0.10.0
libtpu: 0.0.40
codegen_flags: <defaults>
</compile_context>

<pallas_src>
import math

import jax
import jax.numpy as jnp
from jax.experimental import pallas as pl
from jax.experimental.pallas import tpu as pltpu

CIN = 64
COUT = 64
KH = KW = 3
KFUSED = KH * KW * CIN  # 576


def _round_up(x, m):
    return ((x + m - 1) // m) * m


def _choose_tiles(H, W, vmem_budget=40 * 1024 * 1024):
    """Pick (TH, Wr): row-tile height and padded (lane) row width.

    Constraints: TH divides H, TH*Wr is a multiple of 128 (lane-dense output
    blocks), and the per-step VMEM footprint stays well under the 64 MiB v7x
    physical VMEM (headroom for double buffering).
    """
    fallback = None
    for TH in (32, 16, 8, 4, 2, 1):
        if H % TH:
            continue
        lane_mult = max(1, 128 // math.gcd(TH, 128))
        Wr = _round_up(W + 2, lane_mult)
        P = TH * Wr
        vmem = (
            2 * CIN * (TH + 3) * Wr * 4      # double-buffered f32 input tiles
            + 2 * COUT * P * 4               # double-buffered f32 output tiles
            + KFUSED * P * 2                 # bf16 im2col patch scratch
            + COUT * KFUSED * 2              # resident bf16 fused weights
        )
        if vmem > vmem_budget:
            continue
        if fallback is None:
            fallback = (TH, Wr)
        if H // TH >= 2:                     # >=2 row tiles -> pipelining / megacore
            return TH, Wr
    if fallback is not None:
        return fallback
    return 1, _round_up(W + 2, 128)


def _make_kernel(TH, Wr, compute_dtype):
    P = TH * Wr
    # Lane-chunk the matmul / store so the live f32 result stays a few vregs.
    CN = next(c for c in (512, 256, 128) if P % c == 0)

    def kernel(x_ref, w_ref, b_ref, o_ref, patch_ref):
        # x_ref    : (1, 1, CIN, (TH+3)*Wr) f32  row tile (halo rows + guard row)
        # w_ref    : (COUT, KFUSED)         bf16 fused weights (grid-resident)
        # b_ref    : (COUT, 1)              f32
        # o_ref    : (1, COUT, P)           f32  lane-dense output slab
        # patch_ref: (KFUSED, P)            bf16 im2col scratch
        for dh in range(KH):
            for dw in range(KW):
                t = dh * KW + dw
                off = dh * Wr + dw           # static lane offset (shifted copy)
                patch_ref[pl.ds(t * CIN, CIN), :] = (
                    x_ref[0, 0, :, pl.ds(off, P)].astype(compute_dtype))
        # Fused-K matmul per lane chunk: (COUT, 576) @ (576, CN) -> f32 acc.
        for c0 in range(0, P, CN):
            acc = jnp.dot(w_ref[...], patch_ref[:, pl.ds(c0, CN)],
                          preferred_element_type=jnp.float32)
            acc = acc + b_ref[...]           # bias broadcast over lanes
            o_ref[0, :, pl.ds(c0, CN)] = jnp.maximum(acc, 0.0).astype(o_ref.dtype)

    return kernel


def conv_relu_block(x_nchw, weight, bias, *, compute_dtype=jnp.bfloat16):
    """Conv2d(64->64, 3x3, stride 1, pad 1, bias) + ReLU (PyTorch semantics).

    x_nchw: (N, 64, H, W); weight: (64, 64, 3, 3) OIHW; bias: (64,).
    Returns (N, 64, H, W) in x's dtype.
    """
    N, C, H, W = x_nchw.shape
    assert C == CIN
    TH, Wr = _choose_tiles(H, W)
    nT = H // TH
    P = TH * Wr
    Lt = (TH + 3) * Wr

    # Zero-pad once: 1 row above, 1 halo + 1 guard row below, 1 col left,
    # (Wr - W - 1) cols right (lane-width padding, stripped at the end).
    xp = jnp.pad(x_nchw, ((0, 0), (0, 0), (1, 2), (1, Wr - W - 1)))
    # Row tiles with halo/guard rows, channels kept major: (N, nT, CIN, Lt).
    # TODO(synk): for stacked Conv_ReLU_Blocks (VDSR) keep this tiled channel-major
    # layout across layers instead of rebuilding pad+tiles per layer.
    x_tiles = jnp.stack(
        [xp[:, :, i * TH:i * TH + TH + 3, :] for i in range(nT)], axis=1
    ).reshape(N, nT, CIN, Lt)

    # Fused-K weights flattened once: (COUT, 9*CIN), k = (dh*3+dw)*CIN + ci.
    w_fused = jnp.transpose(weight, (0, 2, 3, 1)).reshape(COUT, KFUSED)
    w_fused = w_fused.astype(compute_dtype)
    b2 = bias.reshape(COUT, 1).astype(jnp.float32)

    kernel = _make_kernel(TH, Wr, compute_dtype)

    out_flat = pl.pallas_call(
        kernel,
        out_shape=jax.ShapeDtypeStruct((N, COUT, H * Wr), jnp.float32),
        grid_spec=pltpu.PrefetchScalarGridSpec(
            num_scalar_prefetch=0,
            grid=(N, nT),
            in_specs=[
                pl.BlockSpec((1, 1, CIN, Lt), lambda n, i: (n, i, 0, 0)),
                pl.BlockSpec((COUT, KFUSED), lambda n, i: (0, 0)),
                pl.BlockSpec((COUT, 1), lambda n, i: (0, 0)),
            ],
            out_specs=pl.BlockSpec((1, COUT, P), lambda n, i: (n, 0, i)),
            scratch_shapes=[pltpu.VMEM((KFUSED, P), compute_dtype)],
        ),
        compiler_params=pltpu.CompilerParams(
            dimension_semantics=("parallel", "parallel"),
            vmem_limit_bytes=64 * 1024 * 1024,
        ),
    )(x_tiles, w_fused, b2)

    # Strip the lane-padding columns; already channel-major (NCHW).
    out = out_flat.reshape(N, COUT, H, Wr)[:, :, :, :W]
    return out.astype(x_nchw.dtype)


def _reference(x_nchw, weight, bias):
    out = jax.lax.conv_general_dilated(
        x_nchw, weight,
        window_strides=(1, 1),
        padding=((1, 1), (1, 1)),
        dimension_numbers=("NCHW", "OIHW", "NCHW"),
    )
    return jnp.maximum(out + bias[None, :, None, None], 0.0)


if __name__ == "__main__":
    key = jax.random.PRNGKey(0)
    kx, kw, kb = jax.random.split(key, 3)

    # Module fixes channels at 64; keep batch/spatial small.
    N, H, W = 2, 16, 16
    x = jax.random.normal(kx, (N, CIN, H, W), dtype=jnp.float32)

    # Deterministic synthetic parameters (nn.Conv2d(64, 64, 3) shapes).
    fan_in = CIN * KH * KW
    bound = 1.0 / (fan_in ** 0.5)
    weight = jax.random.uniform(kw, (COUT, CIN, KH, KW),
                                dtype=jnp.float32, minval=-bound, maxval=bound)
    bias = jax.random.uniform(kb, (COUT,),
                              dtype=jnp.float32, minval=-bound, maxval=bound)

    out = jax.block_until_ready(conv_relu_block(x, weight, bias))
    ref = _reference(x, weight, bias)

    assert out.shape == (N, COUT, H, W)
    # bf16 MXU operands with f32 accumulation -> slightly relaxed f32 tolerance.
    assert jnp.allclose(out, ref, atol=1e-2, rtol=1e-2), (
        float(jnp.max(jnp.abs(out - ref))))

    print("KERNEL_OK")
</pallas_src>

<mosaic_0001>
module attributes {stable_mosaic.version = 11 : i64} {
  func.func @kernel(%arg0: i32, %arg1: i32, %arg2: memref<1x1x64x352xf32, #tpu.memory_space<vmem>>, %arg3: memref<64x576xbf16, #tpu.memory_space<vmem>>, %arg4: memref<64x1xf32, #tpu.memory_space<vmem>>, %arg5: memref<1x64x256xf32, #tpu.memory_space<vmem>>, %arg6: memref<576x256xbf16, #tpu.memory_space<vmem>>) attributes {dimension_semantics = [#tpu.dimension_semantics<parallel>, #tpu.dimension_semantics<parallel>], iteration_bounds = array<i64: 2, 2>, scalar_prefetch = 0 : i64, scratch_operands = 1 : i64, tpu.core_type = #tpu.core_type<tc>, window_params = [{transform_indices = @transform_0, window_bounds = array<i64: 1, 1, 64, 352>}, {pipeline_mode = #tpu.pipeline_mode<synchronous>, transform_indices = @transform_1, window_bounds = array<i64: 64, 576>}, {pipeline_mode = #tpu.pipeline_mode<synchronous>, transform_indices = @transform_2, window_bounds = array<i64: 64, 1>}, {transform_indices = @transform_3, window_bounds = array<i64: 1, 64, 256>}]} {
    %c0 = arith.constant 0 : index
    %c0_0 = arith.constant 0 : index
    %c0_1 = arith.constant 0 : index
    %c0_2 = arith.constant 0 : index
    %0 = vector.load %arg2[%c0, %c0_0, %c0_1, %c0_2] : memref<1x1x64x352xf32, #tpu.memory_space<vmem>>, vector<1x1x64x256xf32>
    %1 = vector.shape_cast %0 : vector<1x1x64x256xf32> to vector<64x256xf32>
    %2 = arith.truncf %1 : vector<64x256xf32> to vector<64x256xbf16>
    %c0_3 = arith.constant 0 : index
    %c0_4 = arith.constant 0 : index
    %3 = vector.load %arg6[%c0_3, %c0_4] : memref<576x256xbf16, #tpu.memory_space<vmem>>, vector<64x256xbf16>
    tpu.vector_store %arg6[%c0_3, %c0_4], %2 {strides = array<i32>} : memref<576x256xbf16, #tpu.memory_space<vmem>>, vector<64x256xbf16>,
    %c0_5 = arith.constant 0 : index
    %c0_6 = arith.constant 0 : index
    %c0_7 = arith.constant 0 : index
    %c1 = arith.constant 1 : index
    %4 = vector.load %arg2[%c0_5, %c0_6, %c0_7, %c1] : memref<1x1x64x352xf32, #tpu.memory_space<vmem>>, vector<1x1x64x256xf32>
    %5 = vector.shape_cast %4 : vector<1x1x64x256xf32> to vector<64x256xf32>
    %6 = arith.truncf %5 : vector<64x256xf32> to vector<64x256xbf16>
    %c64 = arith.constant 64 : index
    %c0_8 = arith.constant 0 : index
    %7 = vector.load %arg6[%c64, %c0_8] : memref<576x256xbf16, #tpu.memory_space<vmem>>, vector<64x256xbf16>
    tpu.vector_store %arg6[%c64, %c0_8], %6 {strides = array<i32>} : memref<576x256xbf16, #tpu.memory_space<vmem>>, vector<64x256xbf16>,
    %c0_9 = arith.constant 0 : index
    %c0_10 = arith.constant 0 : index
    %c0_11 = arith.constant 0 : index
    %c2 = arith.constant 2 : index
    %8 = vector.load %arg2[%c0_9, %c0_10, %c0_11, %c2] : memref<1x1x64x352xf32, #tpu.memory_space<vmem>>, vector<1x1x64x256xf32>
    %9 = vector.shape_cast %8 : vector<1x1x64x256xf32> to vector<64x256xf32>
    %10 = arith.truncf %9 : vector<64x256xf32> to vector<64x256xbf16>
    %c128 = arith.constant 128 : index
    %c0_12 = arith.constant 0 : index
    %11 = vector.load %arg6[%c128, %c0_12] : memref<576x256xbf16, #tpu.memory_space<vmem>>, vector<64x256xbf16>
    tpu.vector_store %arg6[%c128, %c0_12], %10 {strides = array<i32>} : memref<576x256xbf16, #tpu.memory_space<vmem>>, vector<64x256xbf16>,
    %c0_13 = arith.constant 0 : index
    %c0_14 = arith.constant 0 : index
    %c0_15 = arith.constant 0 : index
    %c32 = arith.constant 32 : index
    %12 = vector.load %arg2[%c0_13, %c0_14, %c0_15, %c32] : memref<1x1x64x352xf32, #tpu.memory_space<vmem>>, vector<1x1x64x256xf32>
    %13 = vector.shape_cast %12 : vector<1x1x64x256xf32> to vector<64x256xf32>
    %14 = arith.truncf %13 : vector<64x256xf32> to vector<64x256xbf16>
    %c192 = arith.constant 192 : index
    %c0_16 = arith.constant 0 : index
    %15 = vector.load %arg6[%c192, %c0_16] : memref<576x256xbf16, #tpu.memory_space<vmem>>, vector<64x256xbf16>
    tpu.vector_store %arg6[%c192, %c0_16], %14 {strides = array<i32>} : memref<576x256xbf16, #tpu.memory_space<vmem>>, vector<64x256xbf16>,
    %c0_17 = arith.constant 0 : index
    %c0_18 = arith.constant 0 : index
    %c0_19 = arith.constant 0 : index
    %c33 = arith.constant 33 : index
    %16 = vector.load %arg2[%c0_17, %c0_18, %c0_19, %c33] : memref<1x1x64x352xf32, #tpu.memory_space<vmem>>, vector<1x1x64x256xf32>
    %17 = vector.shape_cast %16 : vector<1x1x64x256xf32> to vector<64x256xf32>
    %18 = arith.truncf %17 : vector<64x256xf32> to vector<64x256xbf16>
    %c256 = arith.constant 256 : index
    %c0_20 = arith.constant 0 : index
    %19 = vector.load %arg6[%c256, %c0_20] : memref<576x256xbf16, #tpu.memory_space<vmem>>, vector<64x256xbf16>
    tpu.vector_store %arg6[%c256, %c0_20], %18 {strides = array<i32>} : memref<576x256xbf16, #tpu.memory_space<vmem>>, vector<64x256xbf16>,
    %c0_21 = arith.constant 0 : index
    %c0_22 = arith.constant 0 : index
    %c0_23 = arith.constant 0 : index
    %c34 = arith.constant 34 : index
    %20 = vector.load %arg2[%c0_21, %c0_22, %c0_23, %c34] : memref<1x1x64x352xf32, #tpu.memory_space<vmem>>, vector<1x1x64x256xf32>
    %21 = vector.shape_cast %20 : vector<1x1x64x256xf32> to vector<64x256xf32>
    %22 = arith.truncf %21 : vector<64x256xf32> to vector<64x256xbf16>
    %c320 = arith.constant 320 : index
    %c0_24 = arith.constant 0 : index
    %23 = vector.load %arg6[%c320, %c0_24] : memref<576x256xbf16, #tpu.memory_space<vmem>>, vector<64x256xbf16>
    tpu.vector_store %arg6[%c320, %c0_24], %22 {strides = array<i32>} : memref<576x256xbf16, #tpu.memory_space<vmem>>, vector<64x256xbf16>,
    %c0_25 = arith.constant 0 : index
    %c0_26 = arith.constant 0 : index
    %c0_27 = arith.constant 0 : index
    %c64_28 = arith.constant 64 : index
    %24 = vector.load %arg2[%c0_25, %c0_26, %c0_27, %c64_28] : memref<1x1x64x352xf32, #tpu.memory_space<vmem>>, vector<1x1x64x256xf32>
    %25 = vector.shape_cast %24 : vector<1x1x64x256xf32> to vector<64x256xf32>
    %26 = arith.truncf %25 : vector<64x256xf32> to vector<64x256xbf16>
    %c384 = arith.constant 384 : index
    %c0_29 = arith.constant 0 : index
    %27 = vector.load %arg6[%c384, %c0_29] : memref<576x256xbf16, #tpu.memory_space<vmem>>, vector<64x256xbf16>
    tpu.vector_store %arg6[%c384, %c0_29], %26 {strides = array<i32>} : memref<576x256xbf16, #tpu.memory_space<vmem>>, vector<64x256xbf16>,
    %c0_30 = arith.constant 0 : index
    %c0_31 = arith.constant 0 : index
    %c0_32 = arith.constant 0 : index
    %c65 = arith.constant 65 : index
    %28 = vector.load %arg2[%c0_30, %c0_31, %c0_32, %c65] : memref<1x1x64x352xf32, #tpu.memory_space<vmem>>, vector<1x1x64x256xf32>
    %29 = vector.shape_cast %28 : vector<1x1x64x256xf32> to vector<64x256xf32>
    %30 = arith.truncf %29 : vector<64x256xf32> to vector<64x256xbf16>
    %c448 = arith.constant 448 : index
    %c0_33 = arith.constant 0 : index
    %31 = vector.load %arg6[%c448, %c0_33] : memref<576x256xbf16, #tpu.memory_space<vmem>>, vector<64x256xbf16>
    tpu.vector_store %arg6[%c448, %c0_33], %30 {strides = array<i32>} : memref<576x256xbf16, #tpu.memory_space<vmem>>, vector<64x256xbf16>,
    %c0_34 = arith.constant 0 : index
    %c0_35 = arith.constant 0 : index
    %c0_36 = arith.constant 0 : index
    %c66 = arith.constant 66 : index
    %32 = vector.load %arg2[%c0_34, %c0_35, %c0_36, %c66] : memref<1x1x64x352xf32, #tpu.memory_space<vmem>>, vector<1x1x64x256xf32>
    %33 = vector.shape_cast %32 : vector<1x1x64x256xf32> to vector<64x256xf32>
    %34 = arith.truncf %33 : vector<64x256xf32> to vector<64x256xbf16>
    %c512 = arith.constant 512 : index
    %c0_37 = arith.constant 0 : index
    %35 = vector.load %arg6[%c512, %c0_37] : memref<576x256xbf16, #tpu.memory_space<vmem>>, vector<64x256xbf16>
    tpu.vector_store %arg6[%c512, %c0_37], %34 {strides = array<i32>} : memref<576x256xbf16, #tpu.memory_space<vmem>>, vector<64x256xbf16>,
    %c0_38 = arith.constant 0 : index
    %c0_39 = arith.constant 0 : index
    %36 = vector.load %arg3[%c0_38, %c0_39] : memref<64x576xbf16, #tpu.memory_space<vmem>>, vector<64x576xbf16>
    %c0_40 = arith.constant 0 : index
    %c0_41 = arith.constant 0 : index
    %37 = vector.load %arg6[%c0_40, %c0_41] : memref<576x256xbf16, #tpu.memory_space<vmem>>, vector<576x256xbf16>
    %cst = arith.constant dense<0.000000e+00> : vector<64x256xf32>
    %38 = tpu.matmul %36, %37, %cst {dimension_numbers = #tpu.dot_dimension_numbers<[1], [0], [0], [1], [0, 0, 1, 1], [], []>} : vector<64x576xbf16>, vector<576x256xbf16>, vector<64x256xf32> -> vector<64x256xf32>
    %c0_42 = arith.constant 0 : index
    %c0_43 = arith.constant 0 : index
    %39 = vector.load %arg4[%c0_42, %c0_43] : memref<64x1xf32, #tpu.memory_space<vmem>>, vector<64x1xf32>
    %40 = vector.broadcast %39 : vector<64x1xf32> to vector<64x256xf32>
    %41 = arith.addf %38, %40 : vector<64x256xf32>
    %cst_44 = arith.constant 0.000000e+00 : f32
    %42 = vector.broadcast %cst_44 : f32 to vector<64x256xf32>
    %43 = arith.maximumf %41, %42 : vector<64x256xf32>
    %c0_45 = arith.constant 0 : index
    %c0_46 = arith.constant 0 : index
    %c0_47 = arith.constant 0 : index
    %44 = vector.load %arg5[%c0_45, %c0_46, %c0_47] : memref<1x64x256xf32, #tpu.memory_space<vmem>>, vector<1x64x256xf32>
    %45 = vector.shape_cast %44 : vector<1x64x256xf32> to vector<64x256xf32>
    %46 = vector.shape_cast %43 : vector<64x256xf32> to vector<1x64x256xf32>
    tpu.vector_store %arg5[%c0_45, %c0_46, %c0_47], %46 {strides = array<i32>} : memref<1x64x256xf32, #tpu.memory_space<vmem>>, vector<1x64x256xf32>,
    return
  }
  func.func @transform_0(%arg0: i32, %arg1: i32) -> (i32, i32, i32, i32) {
    %c0_i32 = arith.constant 0 : i32
    %c0_i32_0 = arith.constant 0 : i32
    %c0_i32_1 = arith.constant 0 : i32
    return %arg0, %arg1, %c0_i32, %c0_i32_0 : i32, i32, i32, i32
  }
  func.func @transform_1(%arg0: i32, %arg1: i32) -> (i32, i32) {
    %c0_i32 = arith.constant 0 : i32
    %c0_i32_0 = arith.constant 0 : i32
    %c0_i32_1 = arith.constant 0 : i32
    return %c0_i32, %c0_i32_0 : i32, i32
  }
  func.func @transform_2(%arg0: i32, %arg1: i32) -> (i32, i32) {
    %c0_i32 = arith.constant 0 : i32
    %c0_i32_0 = arith.constant 0 : i32
    %c0_i32_1 = arith.constant 0 : i32
    return %c0_i32, %c0_i32_0 : i32, i32
  }
  func.func @transform_3(%arg0: i32, %arg1: i32) -> (i32, i32, i32) {
    %c0_i32 = arith.constant 0 : i32
    %c0_i32_0 = arith.constant 0 : i32
    return %arg0, %c0_i32, %arg1 : i32, i32, i32
  }
}

</mosaic_0001>

<llo_original>
// kernel: tpu_custom_call.1
$region0: #{tpu_custom_call.1}
  #allocation0 [shape = 'u32[]', space=smem, size = 0x4, offset = 0x4, fixed_abs, tag = 'smem constant byte address 0x4 - core index']
  #allocation1 [shape = 'u32[72,128]{1,0:T(1,128)}', space=vmem, size = 0x9000, scoped, tag = 'internal scratch']
  #allocation2 [shape = 'bf16[576,256]{1,0:T(8,128)(2,1)}', space=vmem, size = 0x48000, scoped, tag = 'scratch operand']
  %s0 = inlined_call_operand.hbm [shape: f32[2,2,64,352], index: 0, kind: input, shape index: {}]
  %s1 = inlined_call_operand.hbm [shape: bf16[64,576], index: 1, kind: input, shape index: {}]
  %s2 = inlined_call_operand.vmem [shape: f32[64,1], index: 2, kind: input, shape index: {}]
  %s3 = inlined_call_operand.hbm [shape: f32[2,64,512], index: 3, kind: output, shape index: {}]
  %s4 = sld [smem:[#allocation0]]
  $region53: #{tpu_custom_call.1} parent=0
    _
  %s6 = ssub.s32 1, %s4
  %s7 = scalar_select 0, %s6, %s4
  $region1: #{tpu_custom_call.1} parent=0
    #allocation3 [shape = 'u8[196608]{0}', space=vmem, size = 0x30000, scoped, tag = 'input window, operand 0']
    #allocation4 [shape = 's32[2]{0}', space=sflag, size = 0x8, scoped, tag = 'scoped memory for tpu_custom_call.1']
    #allocation5 [shape = 's32[2]{0}', space=sflag, size = 0x8, scoped, tag = 'scoped memory for tpu_custom_call.1']
    #allocation6 [shape = 'u8[81920]{0}', space=vmem, size = 0x14000, scoped, tag = 'input window, operand 1, single buffered']
    #allocation7 [shape = 's32[1]{0}', space=sflag, size = 0x4, scoped, tag = 'scoped memory for tpu_custom_call.1']
    #allocation8 [shape = 'u8[131072]{0}', space=vmem, size = 0x20000, scoped, tag = 'output window, operand 0']
    %8 = vsyncpa [#allocation4], 0
    %s9 = scalar_lea.sflag [#allocation4], 1
    %10 = vsyncpa %s9, 0
    %11 = vsyncpa [#allocation7], 0
    %12 = vsyncpa [#allocation5], 0
    %s13 = scalar_lea.sflag [#allocation5], 1
    %14 = vsyncpa %s13, 0
    loop: start=0, step=1, limit=6
    $region2: #{tpu_custom_call.1} parent=1 // loop_pre_header
      _
    $region3: #{tpu_custom_call.1} parent=1 // loop_header
      %s16 = sphi 0, %s20
      %p17 = scmp.ge.s32.totalorder %s16, 6
      %s23 = sphi 0, %s35
      %s24 = sphi 0, %s31
      %s25 = sphi 0, %s23
      %s26 = sphi 0, %s24
      %s27 = sphi 0, %s25
      %s28 = sphi 0, %s26
      %s40 = sphi 0, %s42
      %s43 = sphi 0, %s40
      %s44 = sphi 0, %s43
      %s60 = sphi 0, %s44
      %s64 = sphi 0, %s64
      %s66 = sphi 0, %s64
      %s67 = sphi 0, %s66
      %s81 = sphi 0, %s67
      %s85 = sphi 0, %s85
      %s87 = sphi 0, %s85
      %s88 = sphi 0, %s87
      %s102 = sphi 0, %s88
      %s110 = sphi 0, %s112
      %s113 = sphi 0, %s110
      %s114 = sphi 0, %s113
      %s130 = sphi 0, %s114
    $region4: #{tpu_custom_call.1} parent=1 // loop_header_branch
      %19 = sbr.rel (%p17) target = $region8
    $region5: #{tpu_custom_call.1} parent=1 // loop_body
      %s21 = ssub.s32 %s16, 1
      %s22 = ssub.s32 %s16, 2
      %s29 = sadd.s32 1, %s24
      %p30 = scmp.ge.s32.totalorder %s29, 2
      %s31 = scalar_select %p30, 0, %s29
      %s32 = sadd.s32 1, %s23
      %s33 = scalar_select %p30, %s32, %s23
      %p34 = scmp.ge.s32.totalorder %s33, 2
      %s35 = scalar_select %p34, 0, %s33
      %s36 = ssub.s32 %s23, %s35
      %s37 = ssub.s32 %s24, %s31
      %s38 = sor.u32 %s36, %s37
      %p39 = scmp.eq.s32.totalorder %s38, 0
      %s41 = sadd.s32 %s40, 1
      %s42 = scalar_select %p39, %s40, %s41
      %p45 = pneg %p39
      %p46 = scmp.eq.s32.totalorder %s16, 3
      %p47 = por %p45, %p46
      %p48 = scmp.ne.s32.totalorder %s40, %s43
      %p49 = scmp.eq.s32.totalorder %s16, 0
      %p50 = por %p48, %p49
      %p51 = scmp.ne.s32.totalorder %s40, %s43
      %p52 = scmp.eq.s32.totalorder %s21, 3
      %p53 = por %p51, %p52
      %p54 = scmp.ne.s32.totalorder %s43, %s44
      %p55 = scmp.eq.s32.totalorder %s21, 0
      %p56 = por %p54, %p55
      %p57 = scmp.ne.s32.totalorder %s43, %s44
      %p58 = scmp.eq.s32.totalorder %s22, 3
      %p59 = por %p57, %p58
      %p61 = scmp.ne.s32.totalorder %s44, %s60
      %p62 = scmp.eq.s32.totalorder %s22, 0
      %p63 = por %p61, %p62
      %s65 = sadd.s32 %s64, 1
      %p68 = scmp.eq.s32.totalorder %s16, 3
      %p69 = scmp.ne.s32.totalorder %s64, %s66
      %p70 = scmp.eq.s32.totalorder %s16, 0
      %p71 = por %p69, %p70
      %p72 = scmp.ne.s32.totalorder %s64, %s66
      %p73 = scmp.eq.s32.totalorder %s21, 3
      %p74 = por %p72, %p73
      %p75 = scmp.ne.s32.totalorder %s66, %s67
      %p76 = scmp.eq.s32.totalorder %s21, 0
      %p77 = por %p75, %p76
      %p78 = scmp.ne.s32.totalorder %s66, %s67
      %p79 = scmp.eq.s32.totalorder %s22, 3
      %p80 = por %p78, %p79
      %p82 = scmp.ne.s32.totalorder %s67, %s81
      %p83 = scmp.eq.s32.totalorder %s22, 0
      %p84 = por %p82, %p83
      %s86 = sadd.s32 %s85, 1
      %p89 = scmp.eq.s32.totalorder %s16, 3
      %p90 = scmp.ne.s32.totalorder %s85, %s87
      %p91 = scmp.eq.s32.totalorder %s16, 0
      %p92 = por %p90, %p91
      %p93 = scmp.ne.s32.totalorder %s85, %s87
      %p94 = scmp.eq.s32.totalorder %s21, 3
      %p95 = por %p93, %p94
      %p96 = scmp.ne.s32.totalorder %s87, %s88
      %p97 = scmp.eq.s32.totalorder %s21, 0
      %p98 = por %p96, %p97
      %p99 = scmp.ne.s32.totalorder %s87, %s88
      %p100 = scmp.eq.s32.totalorder %s22, 3
      %p101 = por %p99, %p100
      %p103 = scmp.ne.s32.totalorder %s88, %s102
      %p104 = scmp.eq.s32.totalorder %s22, 0
      %p105 = por %p103, %p104
      %s106 = ssub.s32 %s23, %s35
      %s107 = ssub.s32 %s24, %s31
      %s108 = sor.u32 %s106, %s107
      %p109 = scmp.eq.s32.totalorder %s108, 0
      %s111 = sadd.s32 %s110, 1
      %s112 = scalar_select %p109, %s110, %s111
      %p115 = pneg %p109
      %p116 = scmp.eq.s32.totalorder %s16, 3
      %p117 = por %p115, %p116
      %p118 = scmp.ne.s32.totalorder %s110, %s113
      %p119 = scmp.eq.s32.totalorder %s16, 0
      %p120 = por %p118, %p119
      %p121 = scmp.ne.s32.totalorder %s110, %s113
      %p122 = scmp.eq.s32.totalorder %s21, 3
      %p123 = por %p121, %p122
      %p124 = scmp.ne.s32.totalorder %s113, %s114
      %p125 = scmp.eq.s32.totalorder %s21, 0
      %p126 = por %p124, %p125
      %p127 = scmp.ne.s32.totalorder %s113, %s114
      %p128 = scmp.eq.s32.totalorder %s22, 3
      %p129 = por %p127, %p128
      %p131 = scmp.ne.s32.totalorder %s114, %s130
      %p132 = scmp.eq.s32.totalorder %s22, 0
      %p133 = por %p131, %p132
      %p134 = scmp.le.s32.totalorder 1, %s16
      %p135 = scmp.lt.s32.totalorder %s16, 5
      %p136 = pnand %p134, %p135
      %p137 = pneg %p136
      // Predicated region
      $region9: #{tpu_custom_call.1} parent=5 // pred_check
        _
      $region10: #{tpu_custom_call.1} parent=5 // pred_check_branch
        %139 = sbr.rel (%p136) target = $region12
      $region11: #{tpu_custom_call.1} parent=5 // pred_region
        %s140 = ssub.s32 %s16, 1
        // Predicated region
        $region13: #{tpu_custom_call.1} parent=11 // pred_check
          %p141 = pneg %p77
        $region14: #{tpu_custom_call.1} parent=11 // pred_check_branch
          %143 = sbr.rel (%p141) target = $region16
        $region15: #{tpu_custom_call.1} parent=11 // pred_region
          %145 = vsyncadd [#allocation7], 0
          %s146 = sshll.u32 %s1, 4
          %s147 = int_to_ptr.hbm [resolvable:$true] %s146
          %s148 = sshll.u32 [#allocation6], 4
          %s149 = int_to_ptr.vmem [resolvable:$true] %s148
          %154 = dma.hbm_to_vmem [thread:$0]  %s147, 2560, %s149, [#allocation7], 320, 320, 20
        $region16: #{tpu_custom_call.1} parent=11 // pred_fallthru
          _
        // Predicated region
        $region17: #{tpu_custom_call.1} parent=11 // pred_check
          %p155 = pneg %p98
        $region18: #{tpu_custom_call.1} parent=11 // pred_check_branch
          %157 = sbr.rel (%p155) target = $region20
        $region19: #{tpu_custom_call.1} parent=11 // pred_region
          _
        $region20: #{tpu_custom_call.1} parent=11 // pred_fallthru
          _
      $region12: #{tpu_custom_call.1} parent=5 // pred_fallthru
        _
      %p158 = scmp.lt.s32.totalorder %s16, 4
      // Predicated region
      $region21: #{tpu_custom_call.1} parent=5 // pred_check
        %p159 = pneg %p158
      $region22: #{tpu_custom_call.1} parent=5 // pred_check_branch
        %161 = sbr.rel (%p159) target = $region24
      $region23: #{tpu_custom_call.1} parent=5 // pred_region
        // Predicated region
        $region25: #{tpu_custom_call.1} parent=23 // pred_check
          %p162 = pneg %p50
        $region26: #{tpu_custom_call.1} parent=23 // pred_check_branch
          %164 = sbr.rel (%p162) target = $region28
        $region27: #{tpu_custom_call.1} parent=23 // pred_region
          %s165 = sand.u32 %s40, 1
          %s166 = scalar_lea.sflag [#allocation4], %s165
          %s167 = sand.u32 %s40, 1
          %s168 = smul.addr %s167, 192
          %s169 = scalar_lea.vmem [#allocation3], %s168
          %171 = vsyncadd %s166, 0
          %s172 = smul.addr %s24, 24
          %s173 = smul.addr %s23, 48
          %s174 = sadd.s32 %s172, %s173
          %s175 = smul.addr %s174, 8
          %s176 = scalar_lea.hbm %s0, %s175
          %s177 = sshll.u32 %s176, 4
          %s178 = int_to_ptr.hbm [resolvable:$true] %s177
          %s179 = sshll.u32 %s169, 4
          %s180 = int_to_ptr.vmem [resolvable:$true] %s179
          %185 = dma.hbm_to_vmem [thread:$0]  %s178, 3072, %s180, %s166, 384, 384, 24
        $region28: #{tpu_custom_call.1} parent=23 // pred_fallthru
          _
      $region24: #{tpu_custom_call.1} parent=5 // pred_fallthru
        _
      %p186 = scmp.le.s32.totalorder 1, %s16
      %p187 = scmp.lt.s32.totalorder %s16, 5
      %p188 = pnand %p186, %p187
      %p189 = pneg %p188
      // Predicated region
      $region29: #{tpu_custom_call.1} parent=5 // pred_check
        _
      $region30: #{tpu_custom_call.1} parent=5 // pred_check_branch
        %191 = sbr.rel (%p188) target = $region32
      $region31: #{tpu_custom_call.1} parent=5 // pred_region
        %s192 = ssub.s32 %s16, 1
        %s193 = sand.u32 %s43, 1
        %s194 = scalar_lea.sflag [#allocation4], %s193
        %s195 = sand.u32 %s43, 1
        %s196 = smul.addr %s195, 192
        %s197 = scalar_lea.vmem [#allocation3], %s196
        // Predicated region
        $region33: #{tpu_custom_call.1} parent=31 // pred_check
          %p198 = pneg %p56
        $region34: #{tpu_custom_call.1} parent=31 // pred_check_branch
          %200 = sbr.rel (%p198) target = $region36
        $region35: #{tpu_custom_call.1} parent=31 // pred_region
          %202 = dma.done %s194, 3072
        $region36: #{tpu_custom_call.1} parent=31 // pred_fallthru
          _
        // Predicated region
        $region37: #{tpu_custom_call.1} parent=31 // pred_check
          %p203 = pneg %p77
        $region38: #{tpu_custom_call.1} parent=31 // pred_check_branch
          %205 = sbr.rel (%p203) target = $region40
        $region39: #{tpu_custom_call.1} parent=31 // pred_region
          %207 = dma.done [#allocation7], 2560
        $region40: #{tpu_custom_call.1} parent=31 // pred_fallthru
          _
        %s208 = sand.u32 %s43, 1
        %s209 = scalar_lea.sflag [#allocation4], %s208
        %s210 = sand.u32 %s43, 1
        %s211 = smul.addr %s210, 192
        %s212 = scalar_lea.vmem [#allocation3], %s211
        %p213 = pneg %p56
        %p214 = pneg %p53
        %p215 = pneg %p77
        %p216 = pneg %p74
        %p217 = pneg %p98
        %p218 = pneg %p95
        %p219 = pneg %p126
        %p220 = pneg %p123
        %s221 = sand.u32 %s113, 1
        %s222 = scalar_lea.sflag [#allocation5], %s221
        %s223 = sand.u32 %s113, 1
        %s224 = smul.addr %s223, 128
        %s225 = scalar_lea.vmem [#allocation8], %s224
        %s226 = smul.u32 2, %s26
        %v228 = vld [vmem:[%s197] sm:$0xff]
        %v229 = vld [vmem:[%s197 + $0x8] sm:$0xff]
        %v230 = vld [vmem:[%s197 + $0x18] sm:$0xff]
        %v231 = vld [vmem:[%s197 + $0x20] sm:$0xff]
        %v232 = vld [vmem:[%s197 + $0x30] sm:$0xff]
        %v233 = vld [vmem:[%s197 + $0x38] sm:$0xff]
        %v234 = vld [vmem:[%s197 + $0x48] sm:$0xff]
        %v235 = vld [vmem:[%s197 + $0x50] sm:$0xff]
        %v236 = vld [vmem:[%s197 + $0x60] sm:$0xff]
        %v237 = vld [vmem:[%s197 + $0x68] sm:$0xff]
        %v238 = vld [vmem:[%s197 + $0x78] sm:$0xff]
        %v239 = vld [vmem:[%s197 + $0x80] sm:$0xff]
        %v240 = vld [vmem:[%s197 + $0x90] sm:$0xff]
        %v241 = vld [vmem:[%s197 + $0x98] sm:$0xff]
        %v242 = vld [vmem:[%s197 + $0xa8] sm:$0xff]
        %v243 = vld [vmem:[%s197 + $0xb0] sm:$0xff]
        %v244 = vpack.c.bf16 %v229, %v228
        %v245 = vpack.c.bf16 %v231, %v230
        %v246 = vpack.c.bf16 %v233, %v232
        %v247 = vpack.c.bf16 %v235, %v234
        %v248 = vpack.c.bf16 %v237, %v236
        %v249 = vpack.c.bf16 %v239, %v238
        %v250 = vpack.c.bf16 %v241, %v240
        %v251 = vpack.c.bf16 %v243, %v242
        %252 = vst [vmem:[#allocation2] sm:$0xff] %v244
        %253 = vst [vmem:[#allocation2 + $0x8] sm:$0xff] %v245
        %254 = vst [vmem:[#allocation2 + $0x10] sm:$0xff] %v246
        %255 = vst [vmem:[#allocation2 + $0x18] sm:$0xff] %v247
        %256 = vst [vmem:[#allocation2 + $0x20] sm:$0xff] %v248
        %257 = vst [vmem:[#allocation2 + $0x28] sm:$0xff] %v249
        %258 = vst [vmem:[#allocation2 + $0x30] sm:$0xff] %v250
        %259 = vst [vmem:[#allocation2 + $0x38] sm:$0xff] %v251
        %v260 = vld [vmem:[%s197] sm:$0xff]
        %v261 = vld [vmem:[%s197 + $0x8] sm:$0xff]
        %v262 = vld [vmem:[%s197 + $0x10] sm:$0xff]
        %v263 = vld [vmem:[%s197 + $0x18] sm:$0xff]
        %v264 = vld [vmem:[%s197 + $0x20] sm:$0xff]
        %v265 = vld [vmem:[%s197 + $0x28] sm:$0xff]
        %v266 = vld [vmem:[%s197 + $0x30] sm:$0xff]
        %v267 = vld [vmem:[%s197 + $0x38] sm:$0xff]
        %v268 = vld [vmem:[%s197 + $0x40] sm:$0xff]
        %v269 = vld [vmem:[%s197 + $0x48] sm:$0xff]
        %v270 = vld [vmem:[%s197 + $0x50] sm:$0xff]
        %v271 = vld [vmem:[%s197 + $0x58] sm:$0xff]
        %v272 = vld [vmem:[%s197 + $0x60] sm:$0xff]
        %v273 = vld [vmem:[%s197 + $0x68] sm:$0xff]
        %v274 = vld [vmem:[%s197 + $0x70] sm:$0xff]
        %v275 = vld [vmem:[%s197 + $0x78] sm:$0xff]
        %v276 = vld [vmem:[%s197 + $0x80] sm:$0xff]
        %v277 = vld [vmem:[%s197 + $0x88] sm:$0xff]
        %v278 = vld [vmem:[%s197 + $0x90] sm:$0xff]
        %v279 = vld [vmem:[%s197 + $0x98] sm:$0xff]
        %v280 = vld [vmem:[%s197 + $0xa0] sm:$0xff]
        %v281 = vld [vmem:[%s197 + $0xa8] sm:$0xff]
        %v282 = vld [vmem:[%s197 + $0xb0] sm:$0xff]
        %v283 = vld [vmem:[%s197 + $0xb8] sm:$0xff]
        %v284 = vpack.c.bf16 %v261, %v260
        %v285 = vpack.c.bf16 %v262, %v262
        %v286 = vpack.c.bf16 %v264, %v263
        %v287 = vpack.c.bf16 %v265, %v265
        %v288 = vpack.c.bf16 %v267, %v266
        %v289 = vpack.c.bf16 %v268, %v268
        %v290 = vpack.c.bf16 %v270, %v269
        %v291 = vpack.c.bf16 %v271, %v271
        %v292 = vpack.c.bf16 %v273, %v272
        %v293 = vpack.c.bf16 %v274, %v274
        %v294 = vpack.c.bf16 %v276, %v275
        %v295 = vpack.c.bf16 %v277, %v277
        %v296 = vpack.c.bf16 %v279, %v278
        %v297 = vpack.c.bf16 %v280, %v280
        %v298 = vpack.c.bf16 %v282, %v281
        %v299 = vpack.c.bf16 %v283, %v283
        %316 = vrot.lane.b32.xlu0 %v284, 127
        %v317 = vpop.permute.xlu0 %316
        %318 = vrot.lane.b32.xlu0 %v285, 127
        %v319 = vpop.permute.xlu0 %318
        %320 = vrot.lane.b32.xlu0 %v286, 127
        %v321 = vpop.permute.xlu0 %320
        %322 = vrot.lane.b32.xlu0 %v287, 127
        %v323 = vpop.permute.xlu0 %322
        %324 = vrot.lane.b32.xlu0 %v288, 127
        %v325 = vpop.permute.xlu0 %324
        %326 = vrot.lane.b32.xlu0 %v289, 127
        %v327 = vpop.permute.xlu0 %326
        %328 = vrot.lane.b32.xlu0 %v290, 127
        %v329 = vpop.permute.xlu0 %328
        %330 = vrot.lane.b32.xlu0 %v291, 127
        %v331 = vpop.permute.xlu0 %330
        %332 = vrot.lane.b32.xlu0 %v292, 127
        %v333 = vpop.permute.xlu0 %332
        %334 = vrot.lane.b32.xlu0 %v293, 127
        %v335 = vpop.permute.xlu0 %334
        %336 = vrot.lane.b32.xlu0 %v294, 127
        %v337 = vpop.permute.xlu0 %336
        %338 = vrot.lane.b32.xlu0 %v295, 127
        %v339 = vpop.permute.xlu0 %338
        %340 = vrot.lane.b32.xlu0 %v296, 127
        %v341 = vpop.permute.xlu0 %340
        %342 = vrot.lane.b32.xlu0 %v297, 127
        %v343 = vpop.permute.xlu0 %342
        %344 = vrot.lane.b32.xlu0 %v298, 127
        %v345 = vpop.permute.xlu0 %344
        %346 = vrot.lane.b32.xlu0 %v299, 127
        %v347 = vpop.permute.xlu0 %346
        %v348 = vrot.slane %v317, 4
        %v349 = vrot.slane %v319, 4
        %v350 = vrot.slane %v321, 4
        %v351 = vrot.slane %v323, 4
        %v352 = vrot.slane %v325, 4
        %v353 = vrot.slane %v327, 4
        %v354 = vrot.slane %v329, 4
        %v355 = vrot.slane %v331, 4
        %v356 = vrot.slane %v333, 4
        %v357 = vrot.slane %v335, 4
        %v358 = vrot.slane %v337, 4
        %v359 = vrot.slane %v339, 4
        %v360 = vrot.slane %v341, 4
        %v361 = vrot.slane %v343, 4
        %v362 = vrot.slane %v345, 4
        %v363 = vrot.slane %v347, 4
        %vm364 = vcmask 1043456
        %v365 = vsel %vm364, %v348, %v349
        %vm366 = vcmask 1039360
        %v367 = vsel %vm366, %v317, %v365
        %v368 = vsel %vm364, %v350, %v351
        %v369 = vsel %vm366, %v321, %v368
        %v370 = vsel %vm364, %v352, %v353
        %v371 = vsel %vm366, %v325, %v370
        %v372 = vsel %vm364, %v354, %v355
        %v373 = vsel %vm366, %v329, %v372
        %v374 = vsel %vm364, %v356, %v357
        %v375 = vsel %vm366, %v333, %v374
        %v376 = vsel %vm364, %v358, %v359
        %v377 = vsel %vm366, %v337, %v376
        %v378 = vsel %vm364, %v360, %v361
        %v379 = vsel %vm366, %v341, %v378
        %v380 = vsel %vm364, %v362, %v363
        %v381 = vsel %vm366, %v345, %v380
        %390 = vst [vmem:[#allocation2 + $0x40] sm:$0xff] %v367
        %391 = vst [vmem:[#allocation2 + $0x48] sm:$0xff] %v369
        %392 = vst [vmem:[#allocation2 + $0x50] sm:$0xff] %v371
        %393 = vst [vmem:[#allocation2 + $0x58] sm:$0xff] %v373
        %394 = vst [vmem:[#allocation2 + $0x60] sm:$0xff] %v375
        %395 = vst [vmem:[#allocation2 + $0x68] sm:$0xff] %v377
        %396 = vst [vmem:[#allocation2 + $0x70] sm:$0xff] %v379
        %397 = vst [vmem:[#allocation2 + $0x78] sm:$0xff] %v381
        %v398 = vld [vmem:[%s197] sm:$0xff]
        %v399 = vld [vmem:[%s197 + $0x8] sm:$0xff]
        %v400 = vld [vmem:[%s197 + $0x10] sm:$0xff]
        %v401 = vld [vmem:[%s197 + $0x18] sm:$0xff]
        %v402 = vld [vmem:[%s197 + $0x20] sm:$0xff]
        %v403 = vld [vmem:[%s197 + $0x28] sm:$0xff]
        %v404 = vld [vmem:[%s197 + $0x30] sm:$0xff]
        %v405 = vld [vmem:[%s197 + $0x38] sm:$0xff]
        %v406 = vld [vmem:[%s197 + $0x40] sm:$0xff]
        %v407 = vld [vmem:[%s197 + $0x48] sm:$0xff]
        %v408 = vld [vmem:[%s197 + $0x50] sm:$0xff]
        %v409 = vld [vmem:[%s197 + $0x58] sm:$0xff]
        %v410 = vld [vmem:[%s197 + $0x60] sm:$0xff]
        %v411 = vld [vmem:[%s197 + $0x68] sm:$0xff]
        %v412 = vld [vmem:[%s197 + $0x70] sm:$0xff]
        %v413 = vld [vmem:[%s197 + $0x78] sm:$0xff]
        %v414 = vld [vmem:[%s197 + $0x80] sm:$0xff]
        %v415 = vld [vmem:[%s197 + $0x88] sm:$0xff]
        %v416 = vld [vmem:[%s197 + $0x90] sm:$0xff]
        %v417 = vld [vmem:[%s197 + $0x98] sm:$0xff]
        %v418 = vld [vmem:[%s197 + $0xa0] sm:$0xff]
        %v419 = vld [vmem:[%s197 + $0xa8] sm:$0xff]
        %v420 = vld [vmem:[%s197 + $0xb0] sm:$0xff]
        %v421 = vld [vmem:[%s197 + $0xb8] sm:$0xff]
        %v422 = vpack.c.bf16 %v399, %v398
        %v423 = vpack.c.bf16 %v400, %v400
        %v424 = vpack.c.bf16 %v402, %v401
        %v425 = vpack.c.bf16 %v403, %v403
        %v426 = vpack.c.bf16 %v405, %v404
        %v427 = vpack.c.bf16 %v406, %v406
        %v428 = vpack.c.bf16 %v408, %v407
        %v429 = vpack.c.bf16 %v409, %v409
        %v430 = vpack.c.bf16 %v411, %v410
        %v431 = vpack.c.bf16 %v412, %v412
        %v432 = vpack.c.bf16 %v414, %v413
        %v433 = vpack.c.bf16 %v415, %v415
        %v434 = vpack.c.bf16 %v417, %v416
        %v435 = vpack.c.bf16 %v418, %v418
        %v436 = vpack.c.bf16 %v420, %v419
        %v437 = vpack.c.bf16 %v421, %v421
        %454 = vrot.lane.b32.xlu0 %v422, 126
        %v455 = vpop.permute.xlu0 %454
        %456 = vrot.lane.b32.xlu0 %v423, 126
        %v457 = vpop.permute.xlu0 %456
        %458 = vrot.lane.b32.xlu0 %v424, 126
        %v459 = vpop.permute.xlu0 %458
        %460 = vrot.lane.b32.xlu0 %v425, 126
        %v461 = vpop.permute.xlu0 %460
        %462 = vrot.lane.b32.xlu0 %v426, 126
        %v463 = vpop.permute.xlu0 %462
        %464 = vrot.lane.b32.xlu0 %v427, 126
        %v465 = vpop.permute.xlu0 %464
        %466 = vrot.lane.b32.xlu0 %v428, 126
        %v467 = vpop.permute.xlu0 %466
        %468 = vrot.lane.b32.xlu0 %v429, 126
        %v469 = vpop.permute.xlu0 %468
        %470 = vrot.lane.b32.xlu0 %v430, 126
        %v471 = vpop.permute.xlu0 %470
        %472 = vrot.lane.b32.xlu0 %v431, 126
        %v473 = vpop.permute.xlu0 %472
        %474 = vrot.lane.b32.xlu0 %v432, 126
        %v475 = vpop.permute.xlu0 %474
        %476 = vrot.lane.b32.xlu0 %v433, 126
        %v477 = vpop.permute.xlu0 %476
        %478 = vrot.lane.b32.xlu0 %v434, 126
        %v479 = vpop.permute.xlu0 %478
        %480 = vrot.lane.b32.xlu0 %v435, 126
        %v481 = vpop.permute.xlu0 %480
        %482 = vrot.lane.b32.xlu0 %v436, 126
        %v483 = vpop.permute.xlu0 %482
        %484 = vrot.lane.b32.xlu0 %v437, 126
        %v485 = vpop.permute.xlu0 %484
        %v486 = vrot.slane %v455, 4
        %v487 = vrot.slane %v457, 4
        %v488 = vrot.slane %v459, 4
        %v489 = vrot.slane %v461, 4
        %v490 = vrot.slane %v463, 4
        %v491 = vrot.slane %v465, 4
        %v492 = vrot.slane %v467, 4
        %v493 = vrot.slane %v469, 4
        %v494 = vrot.slane %v471, 4
        %v495 = vrot.slane %v473, 4
        %v496 = vrot.slane %v475, 4
        %v497 = vrot.slane %v477, 4
        %v498 = vrot.slane %v479, 4
        %v499 = vrot.slane %v481, 4
        %v500 = vrot.slane %v483, 4
        %v501 = vrot.slane %v485, 4
        %v502 = vsel %vm364, %v486, %v487
        %vm503 = vcmask 1031168
        %v504 = vsel %vm503, %v455, %v502
        %v505 = vsel %vm364, %v488, %v489
        %v506 = vsel %vm503, %v459, %v505
        %v507 = vsel %vm364, %v490, %v491
        %v508 = vsel %vm503, %v463, %v507
        %v509 = vsel %vm364, %v492, %v493
        %v510 = vsel %vm503, %v467, %v509
        %v511 = vsel %vm364, %v494, %v495
        %v512 = vsel %vm503, %v471, %v511
        %v513 = vsel %vm364, %v496, %v497
        %v514 = vsel %vm503, %v475, %v513
        %v515 = vsel %vm364, %v498, %v499
        %v516 = vsel %vm503, %v479, %v515
        %v517 = vsel %vm364, %v500, %v501
        %v518 = vsel %vm503, %v483, %v517
        %527 = vst [vmem:[#allocation2 + $0x80] sm:$0xff] %v504
        %528 = vst [vmem:[#allocation2 + $0x88] sm:$0xff] %v506
        %529 = vst [vmem:[#allocation2 + $0x90] sm:$0xff] %v508
        %530 = vst [vmem:[#allocation2 + $0x98] sm:$0xff] %v510
        %531 = vst [vmem:[#allocation2 + $0xa0] sm:$0xff] %v512
        %532 = vst [vmem:[#allocation2 + $0xa8] sm:$0xff] %v514
        %533 = vst [vmem:[#allocation2 + $0xb0] sm:$0xff] %v516
        %534 = vst [vmem:[#allocation2 + $0xb8] sm:$0xff] %v518
        %v535 = vld [vmem:[%s197] sm:$0xff]
        %v536 = vld [vmem:[%s197 + $0x8] sm:$0xff]
        %v537 = vld [vmem:[%s197 + $0x10] sm:$0xff]
        %v538 = vld [vmem:[%s197 + $0x18] sm:$0xff]
        %v539 = vld [vmem:[%s197 + $0x20] sm:$0xff]
        %v540 = vld [vmem:[%s197 + $0x28] sm:$0xff]
        %v541 = vld [vmem:[%s197 + $0x30] sm:$0xff]
        %v542 = vld [vmem:[%s197 + $0x38] sm:$0xff]
        %v543 = vld [vmem:[%s197 + $0x40] sm:$0xff]
        %v544 = vld [vmem:[%s197 + $0x48] sm:$0xff]
        %v545 = vld [vmem:[%s197 + $0x50] sm:$0xff]
        %v546 = vld [vmem:[%s197 + $0x58] sm:$0xff]
        %v547 = vld [vmem:[%s197 + $0x60] sm:$0xff]
        %v548 = vld [vmem:[%s197 + $0x68] sm:$0xff]
        %v549 = vld [vmem:[%s197 + $0x70] sm:$0xff]
        %v550 = vld [vmem:[%s197 + $0x78] sm:$0xff]
        %v551 = vld [vmem:[%s197 + $0x80] sm:$0xff]
        %v552 = vld [vmem:[%s197 + $0x88] sm:$0xff]
        %v553 = vld [vmem:[%s197 + $0x90] sm:$0xff]
        %v554 = vld [vmem:[%s197 + $0x98] sm:$0xff]
        %v555 = vld [vmem:[%s197 + $0xa0] sm:$0xff]
        %v556 = vld [vmem:[%s197 + $0xa8] sm:$0xff]
        %v557 = vld [vmem:[%s197 + $0xb0] sm:$0xff]
        %v558 = vld [vmem:[%s197 + $0xb8] sm:$0xff]
        %v559 = vpack.c.bf16 %v536, %v535
        %v560 = vpack.c.bf16 %v537, %v537
        %v561 = vpack.c.bf16 %v539, %v538
        %v562 = vpack.c.bf16 %v540, %v540
        %v563 = vpack.c.bf16 %v542, %v541
        %v564 = vpack.c.bf16 %v543, %v543
        %v565 = vpack.c.bf16 %v545, %v544
        %v566 = vpack.c.bf16 %v546, %v546
        %v567 = vpack.c.bf16 %v548, %v547
        %v568 = vpack.c.bf16 %v549, %v549
        %v569 = vpack.c.bf16 %v551, %v550
        %v570 = vpack.c.bf16 %v552, %v552
        %v571 = vpack.c.bf16 %v554, %v553
        %v572 = vpack.c.bf16 %v555, %v555
        %v573 = vpack.c.bf16 %v557, %v556
        %v574 = vpack.c.bf16 %v558, %v558
        %591 = vrot.lane.b32.xlu0 %v559, 96
        %v592 = vpop.permute.xlu0 %591
        %593 = vrot.lane.b32.xlu0 %v560, 96
        %v594 = vpop.permute.xlu0 %593
        %595 = vrot.lane.b32.xlu0 %v561, 96
        %v596 = vpop.permute.xlu0 %595
        %597 = vrot.lane.b32.xlu0 %v562, 96
        %v598 = vpop.permute.xlu0 %597
        %599 = vrot.lane.b32.xlu0 %v563, 96
        %v600 = vpop.permute.xlu0 %599
        %601 = vrot.lane.b32.xlu0 %v564, 96
        %v602 = vpop.permute.xlu0 %601
        %603 = vrot.lane.b32.xlu0 %v565, 96
        %v604 = vpop.permute.xlu0 %603
        %605 = vrot.lane.b32.xlu0 %v566, 96
        %v606 = vpop.permute.xlu0 %605
        %607 = vrot.lane.b32.xlu0 %v567, 96
        %v608 = vpop.permute.xlu0 %607
        %609 = vrot.lane.b32.xlu0 %v568, 96
        %v610 = vpop.permute.xlu0 %609
        %611 = vrot.lane.b32.xlu0 %v569, 96
        %v612 = vpop.permute.xlu0 %611
        %613 = vrot.lane.b32.xlu0 %v570, 96
        %v614 = vpop.permute.xlu0 %613
        %615 = vrot.lane.b32.xlu0 %v571, 96
        %v616 = vpop.permute.xlu0 %615
        %617 = vrot.lane.b32.xlu0 %v572, 96
        %v618 = vpop.permute.xlu0 %617
        %619 = vrot.lane.b32.xlu0 %v573, 96
        %v620 = vpop.permute.xlu0 %619
        %621 = vrot.lane.b32.xlu0 %v574, 96
        %v622 = vpop.permute.xlu0 %621
        %v623 = vrot.slane %v592, 4
        %v624 = vrot.slane %v594, 4
        %v625 = vrot.slane %v596, 4
        %v626 = vrot.slane %v598, 4
        %v627 = vrot.slane %v600, 4
        %v628 = vrot.slane %v602, 4
        %v629 = vrot.slane %v604, 4
        %v630 = vrot.slane %v606, 4
        %v631 = vrot.slane %v608, 4
        %v632 = vrot.slane %v610, 4
        %v633 = vrot.slane %v612, 4
        %v634 = vrot.slane %v614, 4
        %v635 = vrot.slane %v616, 4
        %v636 = vrot.slane %v618, 4
        %v637 = vrot.slane %v620, 4
        %v638 = vrot.slane %v622, 4
        %v639 = vsel %vm364, %v623, %v624
        %vm640 = vcmask 785408
        %v641 = vsel %vm640, %v592, %v639
        %v642 = vsel %vm364, %v625, %v626
        %v643 = vsel %vm640, %v596, %v642
        %v644 = vsel %vm364, %v627, %v628
        %v645 = vsel %vm640, %v600, %v644
        %v646 = vsel %vm364, %v629, %v630
        %v647 = vsel %vm640, %v604, %v646
        %v648 = vsel %vm364, %v631, %v632
        %v649 = vsel %vm640, %v608, %v648
        %v650 = vsel %vm364, %v633, %v634
        %v651 = vsel %vm640, %v612, %v650
        %v652 = vsel %vm364, %v635, %v636
        %v653 = vsel %vm640, %v616, %v652
        %v654 = vsel %vm364, %v637, %v638
        %v655 = vsel %vm640, %v620, %v654
        %664 = vst [vmem:[#allocation2 + $0xc0] sm:$0xff] %v641
        %665 = vst [vmem:[#allocation2 + $0xc8] sm:$0xff] %v643
        %666 = vst [vmem:[#allocation2 + $0xd0] sm:$0xff] %v645
        %667 = vst [vmem:[#allocation2 + $0xd8] sm:$0xff] %v647
        %668 = vst [vmem:[#allocation2 + $0xe0] sm:$0xff] %v649
        %669 = vst [vmem:[#allocation2 + $0xe8] sm:$0xff] %v651
        %670 = vst [vmem:[#allocation2 + $0xf0] sm:$0xff] %v653
        %671 = vst [vmem:[#allocation2 + $0xf8] sm:$0xff] %v655
        %v672 = vld [vmem:[%s197] sm:$0xff]
        %v673 = vld [vmem:[%s197 + $0x8] sm:$0xff]
        %v674 = vld [vmem:[%s197 + $0x10] sm:$0xff]
        %v675 = vld [vmem:[%s197 + $0x18] sm:$0xff]
        %v676 = vld [vmem:[%s197 + $0x20] sm:$0xff]
        %v677 = vld [vmem:[%s197 + $0x28] sm:$0xff]
        %v678 = vld [vmem:[%s197 + $0x30] sm:$0xff]
        %v679 = vld [vmem:[%s197 + $0x38] sm:$0xff]
        %v680 = vld [vmem:[%s197 + $0x40] sm:$0xff]
        %v681 = vld [vmem:[%s197 + $0x48] sm:$0xff]
        %v682 = vld [vmem:[%s197 + $0x50] sm:$0xff]
        %v683 = vld [vmem:[%s197 + $0x58] sm:$0xff]
        %v684 = vld [vmem:[%s197 + $0x60] sm:$0xff]
        %v685 = vld [vmem:[%s197 + $0x68] sm:$0xff]
        %v686 = vld [vmem:[%s197 + $0x70] sm:$0xff]
        %v687 = vld [vmem:[%s197 + $0x78] sm:$0xff]
        %v688 = vld [vmem:[%s197 + $0x80] sm:$0xff]
        %v689 = vld [vmem:[%s197 + $0x88] sm:$0xff]
        %v690 = vld [vmem:[%s197 + $0x90] sm:$0xff]
        %v691 = vld [vmem:[%s197 + $0x98] sm:$0xff]
        %v692 = vld [vmem:[%s197 + $0xa0] sm:$0xff]
        %v693 = vld [vmem:[%s197 + $0xa8] sm:$0xff]
        %v694 = vld [vmem:[%s197 + $0xb0] sm:$0xff]
        %v695 = vld [vmem:[%s197 + $0xb8] sm:$0xff]
        %v696 = vpack.c.bf16 %v673, %v672
        %v697 = vpack.c.bf16 %v674, %v674
        %v698 = vpack.c.bf16 %v676, %v675
        %v699 = vpack.c.bf16 %v677, %v677
        %v700 = vpack.c.bf16 %v679, %v678
        %v701 = vpack.c.bf16 %v680, %v680
        %v702 = vpack.c.bf16 %v682, %v681
        %v703 = vpack.c.bf16 %v683, %v683
        %v704 = vpack.c.bf16 %v685, %v684
        %v705 = vpack.c.bf16 %v686, %v686
        %v706 = vpack.c.bf16 %v688, %v687
        %v707 = vpack.c.bf16 %v689, %v689
        %v708 = vpack.c.bf16 %v691, %v690
        %v709 = vpack.c.bf16 %v692, %v692
        %v710 = vpack.c.bf16 %v694, %v693
        %v711 = vpack.c.bf16 %v695, %v695
        %728 = vrot.lane.b32.xlu0 %v696, 95
        %v729 = vpop.permute.xlu0 %728
        %730 = vrot.lane.b32.xlu0 %v697, 95
        %v731 = vpop.permute.xlu0 %730
        %732 = vrot.lane.b32.xlu0 %v698, 95
        %v733 = vpop.permute.xlu0 %732
        %734 = vrot.lane.b32.xlu0 %v699, 95
        %v735 = vpop.permute.xlu0 %734
        %736 = vrot.lane.b32.xlu0 %v700, 95
        %v737 = vpop.permute.xlu0 %736
        %738 = vrot.lane.b32.xlu0 %v701, 95
        %v739 = vpop.permute.xlu0 %738
        %740 = vrot.lane.b32.xlu0 %v702, 95
        %v741 = vpop.permute.xlu0 %740
        %742 = vrot.lane.b32.xlu0 %v703, 95
        %v743 = vpop.permute.xlu0 %742
        %744 = vrot.lane.b32.xlu0 %v704, 95
        %v745 = vpop.permute.xlu0 %744
        %746 = vrot.lane.b32.xlu0 %v705, 95
        %v747 = vpop.permute.xlu0 %746
        %748 = vrot.lane.b32.xlu0 %v706, 95
        %v749 = vpop.permute.xlu0 %748
        %750 = vrot.lane.b32.xlu0 %v707, 95
        %v751 = vpop.permute.xlu0 %750
        %752 = vrot.lane.b32.xlu0 %v708, 95
        %v753 = vpop.permute.xlu0 %752
        %754 = vrot.lane.b32.xlu0 %v709, 95
        %v755 = vpop.permute.xlu0 %754
        %756 = vrot.lane.b32.xlu0 %v710, 95
        %v757 = vpop.permute.xlu0 %756
        %758 = vrot.lane.b32.xlu0 %v711, 95
        %v759 = vpop.permute.xlu0 %758
        %v760 = vrot.slane %v729, 4
        %v761 = vrot.slane %v731, 4
        %v762 = vrot.slane %v733, 4
        %v763 = vrot.slane %v735, 4
        %v764 = vrot.slane %v737, 4
        %v765 = vrot.slane %v739, 4
        %v766 = vrot.slane %v741, 4
        %v767 = vrot.slane %v743, 4
        %v768 = vrot.slane %v745, 4
        %v769 = vrot.slane %v747, 4
        %v770 = vrot.slane %v749, 4
        %v771 = vrot.slane %v751, 4
        %v772 = vrot.slane %v753, 4
        %v773 = vrot.slane %v755, 4
        %v774 = vrot.slane %v757, 4
        %v775 = vrot.slane %v759, 4
        %v776 = vsel %vm364, %v760, %v761
        %vm777 = vcmask 777216
        %v778 = vsel %vm777, %v729, %v776
        %v779 = vsel %vm364, %v762, %v763
        %v780 = vsel %vm777, %v733, %v779
        %v781 = vsel %vm364, %v764, %v765
        %v782 = vsel %vm777, %v737, %v781
        %v783 = vsel %vm364, %v766, %v767
        %v784 = vsel %vm777, %v741, %v783
        %v785 = vsel %vm364, %v768, %v769
        %v786 = vsel %vm777, %v745, %v785
        %v787 = vsel %vm364, %v770, %v771
        %v788 = vsel %vm777, %v749, %v787
        %v789 = vsel %vm364, %v772, %v773
        %v790 = vsel %vm777, %v753, %v789
        %v791 = vsel %vm364, %v774, %v775
        %v792 = vsel %vm777, %v757, %v791
        %801 = vst [vmem:[#allocation2 + $0x100] sm:$0xff] %v778
        %802 = vst [vmem:[#allocation2 + $0x108] sm:$0xff] %v780
        %803 = vst [vmem:[#allocation2 + $0x110] sm:$0xff] %v782
        %804 = vst [vmem:[#allocation2 + $0x118] sm:$0xff] %v784
        %805 = vst [vmem:[#allocation2 + $0x120] sm:$0xff] %v786
        %806 = vst [vmem:[#allocation2 + $0x128] sm:$0xff] %v788
        %807 = vst [vmem:[#allocation2 + $0x130] sm:$0xff] %v790
        %808 = vst [vmem:[#allocation2 + $0x138] sm:$0xff] %v792
        %v809 = vld [vmem:[%s197] sm:$0xff]
        %v810 = vld [vmem:[%s197 + $0x8] sm:$0xff]
        %v811 = vld [vmem:[%s197 + $0x10] sm:$0xff]
        %v812 = vld [vmem:[%s197 + $0x18] sm:$0xff]
        %v813 = vld [vmem:[%s197 + $0x20] sm:$0xff]
        %v814 = vld [vmem:[%s197 + $0x28] sm:$0xff]
        %v815 = vld [vmem:[%s197 + $0x30] sm:$0xff]
        %v816 = vld [vmem:[%s197 + $0x38] sm:$0xff]
        %v817 = vld [vmem:[%s197 + $0x40] sm:$0xff]
        %v818 = vld [vmem:[%s197 + $0x48] sm:$0xff]
        %v819 = vld [vmem:[%s197 + $0x50] sm:$0xff]
        %v820 = vld [vmem:[%s197 + $0x58] sm:$0xff]
        %v821 = vld [vmem:[%s197 + $0x60] sm:$0xff]
        %v822 = vld [vmem:[%s197 + $0x68] sm:$0xff]
        %v823 = vld [vmem:[%s197 + $0x70] sm:$0xff]
        %v824 = vld [vmem:[%s197 + $0x78] sm:$0xff]
        %v825 = vld [vmem:[%s197 + $0x80] sm:$0xff]
        %v826 = vld [vmem:[%s197 + $0x88] sm:$0xff]
        %v827 = vld [vmem:[%s197 + $0x90] sm:$0xff]
        %v828 = vld [vmem:[%s197 + $0x98] sm:$0xff]
        %v829 = vld [vmem:[%s197 + $0xa0] sm:$0xff]
        %v830 = vld [vmem:[%s197 + $0xa8] sm:$0xff]
        %v831 = vld [vmem:[%s197 + $0xb0] sm:$0xff]
        %v832 = vld [vmem:[%s197 + $0xb8] sm:$0xff]
        %v833 = vpack.c.bf16 %v810, %v809
        %v834 = vpack.c.bf16 %v811, %v811
        %v835 = vpack.c.bf16 %v813, %v812
        %v836 = vpack.c.bf16 %v814, %v814
        %v837 = vpack.c.bf16 %v816, %v815
        %v838 = vpack.c.bf16 %v817, %v817
        %v839 = vpack.c.bf16 %v819, %v818
        %v840 = vpack.c.bf16 %v820, %v820
        %v841 = vpack.c.bf16 %v822, %v821
        %v842 = vpack.c.bf16 %v823, %v823
        %v843 = vpack.c.bf16 %v825, %v824
        %v844 = vpack.c.bf16 %v826, %v826
        %v845 = vpack.c.bf16 %v828, %v827
        %v846 = vpack.c.bf16 %v829, %v829
        %v847 = vpack.c.bf16 %v831, %v830
        %v848 = vpack.c.bf16 %v832, %v832
        %865 = vrot.lane.b32.xlu0 %v833, 94
        %v866 = vpop.permute.xlu0 %865
        %867 = vrot.lane.b32.xlu0 %v834, 94
        %v868 = vpop.permute.xlu0 %867
        %869 = vrot.lane.b32.xlu0 %v835, 94
        %v870 = vpop.permute.xlu0 %869
        %871 = vrot.lane.b32.xlu0 %v836, 94
        %v872 = vpop.permute.xlu0 %871
        %873 = vrot.lane.b32.xlu0 %v837, 94
        %v874 = vpop.permute.xlu0 %873
        %875 = vrot.lane.b32.xlu0 %v838, 94
        %v876 = vpop.permute.xlu0 %875
        %877 = vrot.lane.b32.xlu0 %v839, 94
        %v878 = vpop.permute.xlu0 %877
        %879 = vrot.lane.b32.xlu0 %v840, 94
        %v880 = vpop.permute.xlu0 %879
        %881 = vrot.lane.b32.xlu0 %v841, 94
        %v882 = vpop.permute.xlu0 %881
        %883 = vrot.lane.b32.xlu0 %v842, 94
        %v884 = vpop.permute.xlu0 %883
        %885 = vrot.lane.b32.xlu0 %v843, 94
        %v886 = vpop.permute.xlu0 %885
        %887 = vrot.lane.b32.xlu0 %v844, 94
        %v888 = vpop.permute.xlu0 %887
        %889 = vrot.lane.b32.xlu0 %v845, 94
        %v890 = vpop.permute.xlu0 %889
        %891 = vrot.lane.b32.xlu0 %v846, 94
        %v892 = vpop.permute.xlu0 %891
        %893 = vrot.lane.b32.xlu0 %v847, 94
        %v894 = vpop.permute.xlu0 %893
        %895 = vrot.lane.b32.xlu0 %v848, 94
        %v896 = vpop.permute.xlu0 %895
        %v897 = vrot.slane %v866, 4
        %v898 = vrot.slane %v868, 4
        %v899 = vrot.slane %v870, 4
        %v900 = vrot.slane %v872, 4
        %v901 = vrot.slane %v874, 4
        %v902 = vrot.slane %v876, 4
        %v903 = vrot.slane %v878, 4
        %v904 = vrot.slane %v880, 4
        %v905 = vrot.slane %v882, 4
        %v906 = vrot.slane %v884, 4
        %v907 = vrot.slane %v886, 4
        %v908 = vrot.slane %v888, 4
        %v909 = vrot.slane %v890, 4
        %v910 = vrot.slane %v892, 4
        %v911 = vrot.slane %v894, 4
        %v912 = vrot.slane %v896, 4
        %v913 = vsel %vm364, %v897, %v898
        %vm914 = vcmask 769024
        %v915 = vsel %vm914, %v866, %v913
        %v916 = vsel %vm364, %v899, %v900
        %v917 = vsel %vm914, %v870, %v916
        %v918 = vsel %vm364, %v901, %v902
        %v919 = vsel %vm914, %v874, %v918
        %v920 = vsel %vm364, %v903, %v904
        %v921 = vsel %vm914, %v878, %v920
        %v922 = vsel %vm364, %v905, %v906
        %v923 = vsel %vm914, %v882, %v922
        %v924 = vsel %vm364, %v907, %v908
        %v925 = vsel %vm914, %v886, %v924
        %v926 = vsel %vm364, %v909, %v910
        %v927 = vsel %vm914, %v890, %v926
        %v928 = vsel %vm364, %v911, %v912
        %v929 = vsel %vm914, %v894, %v928
        %938 = vst [vmem:[#allocation2 + $0x140] sm:$0xff] %v915
        %939 = vst [vmem:[#allocation2 + $0x148] sm:$0xff] %v917
        %940 = vst [vmem:[#allocation2 + $0x150] sm:$0xff] %v919
        %941 = vst [vmem:[#allocation2 + $0x158] sm:$0xff] %v921
        %942 = vst [vmem:[#allocation2 + $0x160] sm:$0xff] %v923
        %943 = vst [vmem:[#allocation2 + $0x168] sm:$0xff] %v925
        %944 = vst [vmem:[#allocation2 + $0x170] sm:$0xff] %v927
        %945 = vst [vmem:[#allocation2 + $0x178] sm:$0xff] %v929
        %v946 = vld [vmem:[%s197] sm:$0xff]
        %v947 = vld [vmem:[%s197 + $0x8] sm:$0xff]
        %v948 = vld [vmem:[%s197 + $0x10] sm:$0xff]
        %v949 = vld [vmem:[%s197 + $0x18] sm:$0xff]
        %v950 = vld [vmem:[%s197 + $0x20] sm:$0xff]
        %v951 = vld [vmem:[%s197 + $0x28] sm:$0xff]
        %v952 = vld [vmem:[%s197 + $0x30] sm:$0xff]
        %v953 = vld [vmem:[%s197 + $0x38] sm:$0xff]
        %v954 = vld [vmem:[%s197 + $0x40] sm:$0xff]
        %v955 = vld [vmem:[%s197 + $0x48] sm:$0xff]
        %v956 = vld [vmem:[%s197 + $0x50] sm:$0xff]
        %v957 = vld [vmem:[%s197 + $0x58] sm:$0xff]
        %v958 = vld [vmem:[%s197 + $0x60] sm:$0xff]
        %v959 = vld [vmem:[%s197 + $0x68] sm:$0xff]
        %v960 = vld [vmem:[%s197 + $0x70] sm:$0xff]
        %v961 = vld [vmem:[%s197 + $0x78] sm:$0xff]
        %v962 = vld [vmem:[%s197 + $0x80] sm:$0xff]
        %v963 = vld [vmem:[%s197 + $0x88] sm:$0xff]
        %v964 = vld [vmem:[%s197 + $0x90] sm:$0xff]
        %v965 = vld [vmem:[%s197 + $0x98] sm:$0xff]
        %v966 = vld [vmem:[%s197 + $0xa0] sm:$0xff]
        %v967 = vld [vmem:[%s197 + $0xa8] sm:$0xff]
        %v968 = vld [vmem:[%s197 + $0xb0] sm:$0xff]
        %v969 = vld [vmem:[%s197 + $0xb8] sm:$0xff]
        %v970 = vpack.c.bf16 %v947, %v946
        %v971 = vpack.c.bf16 %v948, %v948
        %v972 = vpack.c.bf16 %v950, %v949
        %v973 = vpack.c.bf16 %v951, %v951
        %v974 = vpack.c.bf16 %v953, %v952
        %v975 = vpack.c.bf16 %v954, %v954
        %v976 = vpack.c.bf16 %v956, %v955
        %v977 = vpack.c.bf16 %v957, %v957
        %v978 = vpack.c.bf16 %v959, %v958
        %v979 = vpack.c.bf16 %v960, %v960
        %v980 = vpack.c.bf16 %v962, %v961
        %v981 = vpack.c.bf16 %v963, %v963
        %v982 = vpack.c.bf16 %v965, %v964
        %v983 = vpack.c.bf16 %v966, %v966
        %v984 = vpack.c.bf16 %v968, %v967
        %v985 = vpack.c.bf16 %v969, %v969
        %1002 = vrot.lane.b32.xlu0 %v970, 64
        %v1003 = vpop.permute.xlu0 %1002
        %1004 = vrot.lane.b32.xlu0 %v971, 64
        %v1005 = vpop.permute.xlu0 %1004
        %1006 = vrot.lane.b32.xlu0 %v972, 64
        %v1007 = vpop.permute.xlu0 %1006
        %1008 = vrot.lane.b32.xlu0 %v973, 64
        %v1009 = vpop.permute.xlu0 %1008
        %1010 = vrot.lane.b32.xlu0 %v974, 64
        %v1011 = vpop.permute.xlu0 %1010
        %1012 = vrot.lane.b32.xlu0 %v975, 64
        %v1013 = vpop.permute.xlu0 %1012
        %1014 = vrot.lane.b32.xlu0 %v976, 64
        %v1015 = vpop.permute.xlu0 %1014
        %1016 = vrot.lane.b32.xlu0 %v977, 64
        %v1017 = vpop.permute.xlu0 %1016
        %1018 = vrot.lane.b32.xlu0 %v978, 64
        %v1019 = vpop.permute.xlu0 %1018
        %1020 = vrot.lane.b32.xlu0 %v979, 64
        %v1021 = vpop.permute.xlu0 %1020
        %1022 = vrot.lane.b32.xlu0 %v980, 64
        %v1023 = vpop.permute.xlu0 %1022
        %1024 = vrot.lane.b32.xlu0 %v981, 64
        %v1025 = vpop.permute.xlu0 %1024
        %1026 = vrot.lane.b32.xlu0 %v982, 64
        %v1027 = vpop.permute.xlu0 %1026
        %1028 = vrot.lane.b32.xlu0 %v983, 64
        %v1029 = vpop.permute.xlu0 %1028
        %1030 = vrot.lane.b32.xlu0 %v984, 64
        %v1031 = vpop.permute.xlu0 %1030
        %1032 = vrot.lane.b32.xlu0 %v985, 64
        %v1033 = vpop.permute.xlu0 %1032
        %v1034 = vrot.slane %v1003, 4
        %v1035 = vrot.slane %v1005, 4
        %v1036 = vrot.slane %v1007, 4
        %v1037 = vrot.slane %v1009, 4
        %v1038 = vrot.slane %v1011, 4
        %v1039 = vrot.slane %v1013, 4
        %v1040 = vrot.slane %v1015, 4
        %v1041 = vrot.slane %v1017, 4
        %v1042 = vrot.slane %v1019, 4
        %v1043 = vrot.slane %v1021, 4
        %v1044 = vrot.slane %v1023, 4
        %v1045 = vrot.slane %v1025, 4
        %v1046 = vrot.slane %v1027, 4
        %v1047 = vrot.slane %v1029, 4
        %v1048 = vrot.slane %v1031, 4
        %v1049 = vrot.slane %v1033, 4
        %v1050 = vsel %vm364, %v1034, %v1035
        %vm1051 = vcmask 523264
        %v1052 = vsel %vm1051, %v1003, %v1050
        %v1053 = vsel %vm364, %v1036, %v1037
        %v1054 = vsel %vm1051, %v1007, %v1053
        %v1055 = vsel %vm364, %v1038, %v1039
        %v1056 = vsel %vm1051, %v1011, %v1055
        %v1057 = vsel %vm364, %v1040, %v1041
        %v1058 = vsel %vm1051, %v1015, %v1057
        %v1059 = vsel %vm364, %v1042, %v1043
        %v1060 = vsel %vm1051, %v1019, %v1059
        %v1061 = vsel %vm364, %v1044, %v1045
        %v1062 = vsel %vm1051, %v1023, %v1061
        %v1063 = vsel %vm364, %v1046, %v1047
        %v1064 = vsel %vm1051, %v1027, %v1063
        %v1065 = vsel %vm364, %v1048, %v1049
        %v1066 = vsel %vm1051, %v1031, %v1065
        %1075 = vst [vmem:[#allocation2 + $0x180] sm:$0xff] %v1052
        %1076 = vst [vmem:[#allocation2 + $0x188] sm:$0xff] %v1054
        %1077 = vst [vmem:[#allocation2 + $0x190] sm:$0xff] %v1056
        %1078 = vst [vmem:[#allocation2 + $0x198] sm:$0xff] %v1058
        %1079 = vst [vmem:[#allocation2 + $0x1a0] sm:$0xff] %v1060
        %1080 = vst [vmem:[#allocation2 + $0x1a8] sm:$0xff] %v1062
        %1081 = vst [vmem:[#allocation2 + $0x1b0] sm:$0xff] %v1064
        %1082 = vst [vmem:[#allocation2 + $0x1b8] sm:$0xff] %v1066
        %v1083 = vld [vmem:[%s197] sm:$0xff]
        %v1084 = vld [vmem:[%s197 + $0x8] sm:$0xff]
        %v1085 = vld [vmem:[%s197 + $0x10] sm:$0xff]
        %v1086 = vld [vmem:[%s197 + $0x18] sm:$0xff]
        %v1087 = vld [vmem:[%s197 + $0x20] sm:$0xff]
        %v1088 = vld [vmem:[%s197 + $0x28] sm:$0xff]
        %v1089 = vld [vmem:[%s197 + $0x30] sm:$0xff]
        %v1090 = vld [vmem:[%s197 + $0x38] sm:$0xff]
        %v1091 = vld [vmem:[%s197 + $0x40] sm:$0xff]
        %v1092 = vld [vmem:[%s197 + $0x48] sm:$0xff]
        %v1093 = vld [vmem:[%s197 + $0x50] sm:$0xff]
        %v1094 = vld [vmem:[%s197 + $0x58] sm:$0xff]
        %v1095 = vld [vmem:[%s197 + $0x60] sm:$0xff]
        %v1096 = vld [vmem:[%s197 + $0x68] sm:$0xff]
        %v1097 = vld [vmem:[%s197 + $0x70] sm:$0xff]
        %v1098 = vld [vmem:[%s197 + $0x78] sm:$0xff]
        %v1099 = vld [vmem:[%s197 + $0x80] sm:$0xff]
        %v1100 = vld [vmem:[%s197 + $0x88] sm:$0xff]
        %v1101 = vld [vmem:[%s197 + $0x90] sm:$0xff]
        %v1102 = vld [vmem:[%s197 + $0x98] sm:$0xff]
        %v1103 = vld [vmem:[%s197 + $0xa0] sm:$0xff]
        %v1104 = vld [vmem:[%s197 + $0xa8] sm:$0xff]
        %v1105 = vld [vmem:[%s197 + $0xb0] sm:$0xff]
        %v1106 = vld [vmem:[%s197 + $0xb8] sm:$0xff]
        %v1107 = vpack.c.bf16 %v1084, %v1083
        %v1108 = vpack.c.bf16 %v1085, %v1085
        %v1109 = vpack.c.bf16 %v1087, %v1086
        %v1110 = vpack.c.bf16 %v1088, %v1088
        %v1111 = vpack.c.bf16 %v1090, %v1089
        %v1112 = vpack.c.bf16 %v1091, %v1091
        %v1113 = vpack.c.bf16 %v1093, %v1092
        %v1114 = vpack.c.bf16 %v1094, %v1094
        %v1115 = vpack.c.bf16 %v1096, %v1095
        %v1116 = vpack.c.bf16 %v1097, %v1097
        %v1117 = vpack.c.bf16 %v1099, %v1098
        %v1118 = vpack.c.bf16 %v1100, %v1100
        %v1119 = vpack.c.bf16 %v1102, %v1101
        %v1120 = vpack.c.bf16 %v1103, %v1103
        %v1121 = vpack.c.bf16 %v1105, %v1104
        %v1122 = vpack.c.bf16 %v1106, %v1106
        %1139 = vrot.lane.b32.xlu0 %v1107, 63
        %v1140 = vpop.permute.xlu0 %1139
        %1141 = vrot.lane.b32.xlu0 %v1108, 63
        %v1142 = vpop.permute.xlu0 %1141
        %1143 = vrot.lane.b32.xlu0 %v1109, 63
        %v1144 = vpop.permute.xlu0 %1143
        %1145 = vrot.lane.b32.xlu0 %v1110, 63
        %v1146 = vpop.permute.xlu0 %1145
        %1147 = vrot.lane.b32.xlu0 %v1111, 63
        %v1148 = vpop.permute.xlu0 %1147
        %1149 = vrot.lane.b32.xlu0 %v1112, 63
        %v1150 = vpop.permute.xlu0 %1149
        %1151 = vrot.lane.b32.xlu0 %v1113, 63
        %v1152 = vpop.permute.xlu0 %1151
        %1153 = vrot.lane.b32.xlu0 %v1114, 63
        %v1154 = vpop.permute.xlu0 %1153
        %1155 = vrot.lane.b32.xlu0 %v1115, 63
        %v1156 = vpop.permute.xlu0 %1155
        %1157 = vrot.lane.b32.xlu0 %v1116, 63
        %v1158 = vpop.permute.xlu0 %1157
        %1159 = vrot.lane.b32.xlu0 %v1117, 63
        %v1160 = vpop.permute.xlu0 %1159
        %1161 = vrot.lane.b32.xlu0 %v1118, 63
        %v1162 = vpop.permute.xlu0 %1161
        %1163 = vrot.lane.b32.xlu0 %v1119, 63
        %v1164 = vpop.permute.xlu0 %1163
        %1165 = vrot.lane.b32.xlu0 %v1120, 63
        %v1166 = vpop.permute.xlu0 %1165
        %1167 = vrot.lane.b32.xlu0 %v1121, 63
        %v1168 = vpop.permute.xlu0 %1167
        %1169 = vrot.lane.b32.xlu0 %v1122, 63
        %v1170 = vpop.permute.xlu0 %1169
        %v1171 = vrot.slane %v1140, 4
        %v1172 = vrot.slane %v1142, 4
        %v1173 = vrot.slane %v1144, 4
        %v1174 = vrot.slane %v1146, 4
        %v1175 = vrot.slane %v1148, 4
        %v1176 = vrot.slane %v1150, 4
        %v1177 = vrot.slane %v1152, 4
        %v1178 = vrot.slane %v1154, 4
        %v1179 = vrot.slane %v1156, 4
        %v1180 = vrot.slane %v1158, 4
        %v1181 = vrot.slane %v1160, 4
        %v1182 = vrot.slane %v1162, 4
        %v1183 = vrot.slane %v1164, 4
        %v1184 = vrot.slane %v1166, 4
        %v1185 = vrot.slane %v1168, 4
        %v1186 = vrot.slane %v1170, 4
        %v1187 = vsel %vm364, %v1171, %v1172
        %vm1188 = vcmask 515072
        %v1189 = vsel %vm1188, %v1140, %v1187
        %v1190 = vsel %vm364, %v1173, %v1174
        %v1191 = vsel %vm1188, %v1144, %v1190
        %v1192 = vsel %vm364, %v1175, %v1176
        %v1193 = vsel %vm1188, %v1148, %v1192
        %v1194 = vsel %vm364, %v1177, %v1178
        %v1195 = vsel %vm1188, %v1152, %v1194
        %v1196 = vsel %vm364, %v1179, %v1180
        %v1197 = vsel %vm1188, %v1156, %v1196
        %v1198 = vsel %vm364, %v1181, %v1182
        %v1199 = vsel %vm1188, %v1160, %v1198
        %v1200 = vsel %vm364, %v1183, %v1184
        %v1201 = vsel %vm1188, %v1164, %v1200
        %v1202 = vsel %vm364, %v1185, %v1186
        %v1203 = vsel %vm1188, %v1168, %v1202
        %1212 = vst [vmem:[#allocation2 + $0x1c0] sm:$0xff] %v1189
        %1213 = vst [vmem:[#allocation2 + $0x1c8] sm:$0xff] %v1191
        %1214 = vst [vmem:[#allocation2 + $0x1d0] sm:$0xff] %v1193
        %1215 = vst [vmem:[#allocation2 + $0x1d8] sm:$0xff] %v1195
        %1216 = vst [vmem:[#allocation2 + $0x1e0] sm:$0xff] %v1197
        %1217 = vst [vmem:[#allocation2 + $0x1e8] sm:$0xff] %v1199
        %1218 = vst [vmem:[#allocation2 + $0x1f0] sm:$0xff] %v1201
        %1219 = vst [vmem:[#allocation2 + $0x1f8] sm:$0xff] %v1203
        %v1220 = vld [vmem:[%s197] sm:$0xff]
        %v1221 = vld [vmem:[%s197 + $0x8] sm:$0xff]
        %v1222 = vld [vmem:[%s197 + $0x10] sm:$0xff]
        %v1223 = vld [vmem:[%s197 + $0x18] sm:$0xff]
        %v1224 = vld [vmem:[%s197 + $0x20] sm:$0xff]
        %v1225 = vld [vmem:[%s197 + $0x28] sm:$0xff]
        %v1226 = vld [vmem:[%s197 + $0x30] sm:$0xff]
        %v1227 = vld [vmem:[%s197 + $0x38] sm:$0xff]
        %v1228 = vld [vmem:[%s197 + $0x40] sm:$0xff]
        %v1229 = vld [vmem:[%s197 + $0x48] sm:$0xff]
        %v1230 = vld [vmem:[%s197 + $0x50] sm:$0xff]
        %v1231 = vld [vmem:[%s197 + $0x58] sm:$0xff]
        %v1232 = vld [vmem:[%s197 + $0x60] sm:$0xff]
        %v1233 = vld [vmem:[%s197 + $0x68] sm:$0xff]
        %v1234 = vld [vmem:[%s197 + $0x70] sm:$0xff]
        %v1235 = vld [vmem:[%s197 + $0x78] sm:$0xff]
        %v1236 = vld [vmem:[%s197 + $0x80] sm:$0xff]
        %v1237 = vld [vmem:[%s197 + $0x88] sm:$0xff]
        %v1238 = vld [vmem:[%s197 + $0x90] sm:$0xff]
        %v1239 = vld [vmem:[%s197 + $0x98] sm:$0xff]
        %v1240 = vld [vmem:[%s197 + $0xa0] sm:$0xff]
        %v1241 = vld [vmem:[%s197 + $0xa8] sm:$0xff]
        %v1242 = vld [vmem:[%s197 + $0xb0] sm:$0xff]
        %v1243 = vld [vmem:[%s197 + $0xb8] sm:$0xff]
        %v1244 = vpack.c.bf16 %v1221, %v1220
        %v1245 = vpack.c.bf16 %v1222, %v1222
        %v1246 = vpack.c.bf16 %v1224, %v1223
        %v1247 = vpack.c.bf16 %v1225, %v1225
        %v1248 = vpack.c.bf16 %v1227, %v1226
        %v1249 = vpack.c.bf16 %v1228, %v1228
        %v1250 = vpack.c.bf16 %v1230, %v1229
        %v1251 = vpack.c.bf16 %v1231, %v1231
        %v1252 = vpack.c.bf16 %v1233, %v1232
        %v1253 = vpack.c.bf16 %v1234, %v1234
        %v1254 = vpack.c.bf16 %v1236, %v1235
        %v1255 = vpack.c.bf16 %v1237, %v1237
        %v1256 = vpack.c.bf16 %v1239, %v1238
        %v1257 = vpack.c.bf16 %v1240, %v1240
        %v1258 = vpack.c.bf16 %v1242, %v1241
        %v1259 = vpack.c.bf16 %v1243, %v1243
        %1276 = vrot.lane.b32.xlu0 %v1244, 62
        %v1277 = vpop.permute.xlu0 %1276
        %1278 = vrot.lane.b32.xlu0 %v1245, 62
        %v1279 = vpop.permute.xlu0 %1278
        %1280 = vrot.lane.b32.xlu0 %v1246, 62
        %v1281 = vpop.permute.xlu0 %1280
        %1282 = vrot.lane.b32.xlu0 %v1247, 62
        %v1283 = vpop.permute.xlu0 %1282
        %1284 = vrot.lane.b32.xlu0 %v1248, 62
        %v1285 = vpop.permute.xlu0 %1284
        %1286 = vrot.lane.b32.xlu0 %v1249, 62
        %v1287 = vpop.permute.xlu0 %1286
        %1288 = vrot.lane.b32.xlu0 %v1250, 62
        %v1289 = vpop.permute.xlu0 %1288
        %1290 = vrot.lane.b32.xlu0 %v1251, 62
        %v1291 = vpop.permute.xlu0 %1290
        %1292 = vrot.lane.b32.xlu0 %v1252, 62
        %v1293 = vpop.permute.xlu0 %1292
        %1294 = vrot.lane.b32.xlu0 %v1253, 62
        %v1295 = vpop.permute.xlu0 %1294
        %1296 = vrot.lane.b32.xlu0 %v1254, 62
        %v1297 = vpop.permute.xlu0 %1296
        %1298 = vrot.lane.b32.xlu0 %v1255, 62
        %v1299 = vpop.permute.xlu0 %1298
        %1300 = vrot.lane.b32.xlu0 %v1256, 62
        %v1301 = vpop.permute.xlu0 %1300
        %1302 = vrot.lane.b32.xlu0 %v1257, 62
        %v1303 = vpop.permute.xlu0 %1302
        %1304 = vrot.lane.b32.xlu0 %v1258, 62
        %v1305 = vpop.permute.xlu0 %1304
        %1306 = vrot.lane.b32.xlu0 %v1259, 62
        %v1307 = vpop.permute.xlu0 %1306
        %v1308 = vrot.slane %v1277, 4
        %v1309 = vrot.slane %v1279, 4
        %v1310 = vrot.slane %v1281, 4
        %v1311 = vrot.slane %v1283, 4
        %v1312 = vrot.slane %v1285, 4
        %v1313 = vrot.slane %v1287, 4
        %v1314 = vrot.slane %v1289, 4
        %v1315 = vrot.slane %v1291, 4
        %v1316 = vrot.slane %v1293, 4
        %v1317 = vrot.slane %v1295, 4
        %v1318 = vrot.slane %v1297, 4
        %v1319 = vrot.slane %v1299, 4
        %v1320 = vrot.slane %v1301, 4
        %v1321 = vrot.slane %v1303, 4
        %v1322 = vrot.slane %v1305, 4
        %v1323 = vrot.slane %v1307, 4
        %v1324 = vsel %vm364, %v1308, %v1309
        %vm1325 = vcmask 506880
        %v1326 = vsel %vm1325, %v1277, %v1324
        %v1327 = vsel %vm364, %v1310, %v1311
        %v1328 = vsel %vm1325, %v1281, %v1327
        %v1329 = vsel %vm364, %v1312, %v1313
        %v1330 = vsel %vm1325, %v1285, %v1329
        %v1331 = vsel %vm364, %v1314, %v1315
        %v1332 = vsel %vm1325, %v1289, %v1331
        %v1333 = vsel %vm364, %v1316, %v1317
        %v1334 = vsel %vm1325, %v1293, %v1333
        %v1335 = vsel %vm364, %v1318, %v1319
        %v1336 = vsel %vm1325, %v1297, %v1335
        %v1337 = vsel %vm364, %v1320, %v1321
        %v1338 = vsel %vm1325, %v1301, %v1337
        %v1339 = vsel %vm364, %v1322, %v1323
        %v1340 = vsel %vm1325, %v1305, %v1339
        %1349 = vst [vmem:[#allocation2 + $0x200] sm:$0xff] %v1326
        %1350 = vst [vmem:[#allocation2 + $0x208] sm:$0xff] %v1328
        %1351 = vst [vmem:[#allocation2 + $0x210] sm:$0xff] %v1330
        %1352 = vst [vmem:[#allocation2 + $0x218] sm:$0xff] %v1332
        %1353 = vst [vmem:[#allocation2 + $0x220] sm:$0xff] %v1334
        %1354 = vst [vmem:[#allocation2 + $0x228] sm:$0xff] %v1336
        %1355 = vst [vmem:[#allocation2 + $0x230] sm:$0xff] %v1338
        %1356 = vst [vmem:[#allocation2 + $0x238] sm:$0xff] %v1340
        %v1357 = vld [vmem:[#allocation6] sm:$0xff]
        %v1358 = vld [vmem:[#allocation6 + $0x8] sm:$0xff]
        %v1359 = vld [vmem:[#allocation6 + $0x10] sm:$0xf]
        %v1360 = vld [vmem:[#allocation6 + $0x14] sm:$0xff]
        %v1361 = vld [vmem:[#allocation6 + $0x1c] sm:$0xff]
        %v1362 = vld [vmem:[#allocation6 + $0x24] sm:$0xf]
        %v1363 = vld [vmem:[#allocation6 + $0x28] sm:$0xff]
        %v1364 = vld [vmem:[#allocation6 + $0x30] sm:$0xff]
        %v1365 = vld [vmem:[#allocation6 + $0x38] sm:$0xf]
        %v1366 = vld [vmem:[#allocation6 + $0x3c] sm:$0xff]
        %v1367 = vld [vmem:[#allocation6 + $0x44] sm:$0xff]
        %v1368 = vld [vmem:[#allocation6 + $0x4c] sm:$0xf]
        %v1369 = vld [vmem:[#allocation6 + $0x50] sm:$0xff]
        %v1370 = vld [vmem:[#allocation6 + $0x58] sm:$0xff]
        %v1371 = vld [vmem:[#allocation6 + $0x60] sm:$0xf]
        %v1372 = vld [vmem:[#allocation6 + $0x64] sm:$0xff]
        %v1373 = vld [vmem:[#allocation6 + $0x6c] sm:$0xff]
        %v1374 = vld [vmem:[#allocation6 + $0x74] sm:$0xf]
        %v1375 = vld [vmem:[#allocation6 + $0x78] sm:$0xff]
        %v1376 = vld [vmem:[#allocation6 + $0x80] sm:$0xff]
        %v1377 = vld [vmem:[#allocation6 + $0x88] sm:$0xf]
        %v1378 = vld [vmem:[#allocation6 + $0x8c] sm:$0xff]
        %v1379 = vld [vmem:[#allocation6 + $0x94] sm:$0xff]
        %v1380 = vld [vmem:[#allocation6 + $0x9c] sm:$0xf]
        %v1381 = vld [vmem:[#allocation2] sm:$0xff]
        %v1382 = vld [vmem:[#allocation2 + $0x8] sm:$0xff]
        %v1383 = vld [vmem:[#allocation2 + $0x10] sm:$0xff]
        %v1384 = vld [vmem:[#allocation2 + $0x18] sm:$0xff]
        %v1385 = vld [vmem:[#allocation2 + $0x20] sm:$0xff]
        %v1386 = vld [vmem:[#allocation2 + $0x28] sm:$0xff]
        %v1387 = vld [vmem:[#allocation2 + $0x30] sm:$0xff]
        %v1388 = vld [vmem:[#allocation2 + $0x38] sm:$0xff]
        %v1389 = vld [vmem:[#allocation2 + $0x40] sm:$0xff]
        %v1390 = vld [vmem:[#allocation2 + $0x48] sm:$0xff]
        %v1391 = vld [vmem:[#allocation2 + $0x50] sm:$0xff]
        %v1392 = vld [vmem:[#allocation2 + $0x58] sm:$0xff]
        %v1393 = vld [vmem:[#allocation2 + $0x60] sm:$0xff]
        %v1394 = vld [vmem:[#allocation2 + $0x68] sm:$0xff]
        %v1395 = vld [vmem:[#allocation2 + $0x70] sm:$0xff]
        %v1396 = vld [vmem:[#allocation2 + $0x78] sm:$0xff]
        %v1397 = vld [vmem:[#allocation2 + $0x80] sm:$0xff]
        %v1398 = vld [vmem:[#allocation2 + $0x88] sm:$0xff]
        %v1399 = vld [vmem:[#allocation2 + $0x90] sm:$0xff]
        %v1400 = vld [vmem:[#allocation2 + $0x98] sm:$0xff]
        %v1401 = vld [vmem:[#allocation2 + $0xa0] sm:$0xff]
        %v1402 = vld [vmem:[#allocation2 + $0xa8] sm:$0xff]
        %v1403 = vld [vmem:[#allocation2 + $0xb0] sm:$0xff]
        %v1404 = vld [vmem:[#allocation2 + $0xb8] sm:$0xff]
        %v1405 = vld [vmem:[#allocation2 + $0xc0] sm:$0xff]
        %v1406 = vld [vmem:[#allocation2 + $0xc8] sm:$0xff]
        %v1407 = vld [vmem:[#allocation2 + $0xd0] sm:$0xff]
        %v1408 = vld [vmem:[#allocation2 + $0xd8] sm:$0xff]
        %v1409 = vld [vmem:[#allocation2 + $0xe0] sm:$0xff]
        %v1410 = vld [vmem:[#allocation2 + $0xe8] sm:$0xff]
        %v1411 = vld [vmem:[#allocation2 + $0xf0] sm:$0xff]
        %v1412 = vld [vmem:[#allocation2 + $0xf8] sm:$0xff]
        %v1413 = vld [vmem:[#allocation2 + $0x100] sm:$0xff]
        %v1414 = vld [vmem:[#allocation2 + $0x108] sm:$0xff]
        %v1415 = vld [vmem:[#allocation2 + $0x110] sm:$0xff]
        %v1416 = vld [vmem:[#allocation2 + $0x118] sm:$0xff]
        %v1417 = vld [vmem:[#allocation2 + $0x120] sm:$0xff]
        %v1418 = vld [vmem:[#allocation2 + $0x128] sm:$0xff]
        %v1419 = vld [vmem:[#allocation2 + $0x130] sm:$0xff]
        %v1420 = vld [vmem:[#allocation2 + $0x138] sm:$0xff]
        %v1421 = vld [vmem:[#allocation2 + $0x140] sm:$0xff]
        %v1422 = vld [vmem:[#allocation2 + $0x148] sm:$0xff]
        %v1423 = vld [vmem:[#allocation2 + $0x150] sm:$0xff]
        %v1424 = vld [vmem:[#allocation2 + $0x158] sm:$0xff]
        %v1425 = vld [vmem:[#allocation2 + $0x160] sm:$0xff]
        %v1426 = vld [vmem:[#allocation2 + $0x168] sm:$0xff]
        %v1427 = vld [vmem:[#allocation2 + $0x170] sm:$0xff]
        %v1428 = vld [vmem:[#allocation2 + $0x178] sm:$0xff]
        %v1429 = vld [vmem:[#allocation2 + $0x180] sm:$0xff]
        %v1430 = vld [vmem:[#allocation2 + $0x188] sm:$0xff]
        %v1431 = vld [vmem:[#allocation2 + $0x190] sm:$0xff]
        %v1432 = vld [vmem:[#allocation2 + $0x198] sm:$0xff]
        %v1433 = vld [vmem:[#allocation2 + $0x1a0] sm:$0xff]
        %v1434 = vld [vmem:[#allocation2 + $0x1a8] sm:$0xff]
        %v1435 = vld [vmem:[#allocation2 + $0x1b0] sm:$0xff]
        %v1436 = vld [vmem:[#allocation2 + $0x1b8] sm:$0xff]
        %v1437 = vld [vmem:[#allocation2 + $0x1c0] sm:$0xff]
        %v1438 = vld [vmem:[#allocation2 + $0x1c8] sm:$0xff]
        %v1439 = vld [vmem:[#allocation2 + $0x1d0] sm:$0xff]
        %v1440 = vld [vmem:[#allocation2 + $0x1d8] sm:$0xff]
        %v1441 = vld [vmem:[#allocation2 + $0x1e0] sm:$0xff]
        %v1442 = vld [vmem:[#allocation2 + $0x1e8] sm:$0xff]
        %v1443 = vld [vmem:[#allocation2 + $0x1f0] sm:$0xff]
        %v1444 = vld [vmem:[#allocation2 + $0x1f8] sm:$0xff]
        %v1445 = vld [vmem:[#allocation2 + $0x200] sm:$0xff]
        %v1446 = vld [vmem:[#allocation2 + $0x208] sm:$0xff]
        %v1447 = vld [vmem:[#allocation2 + $0x210] sm:$0xff]
        %v1448 = vld [vmem:[#allocation2 + $0x218] sm:$0xff]
        %v1449 = vld [vmem:[#allocation2 + $0x220] sm:$0xff]
        %v1450 = vld [vmem:[#allocation2 + $0x228] sm:$0xff]
        %v1451 = vld [vmem:[#allocation2 + $0x230] sm:$0xff]
        %v1452 = vld [vmem:[#allocation2 + $0x238] sm:$0xff]
        %v1453 = vld [vmem:[%s2] sm:$0xff]
        %v1454 = vld [vmem:[%s2 + $0x8] sm:$0xff]
        %v1455 = vld [vmem:[%s2 + $0x10] sm:$0xff]
        %v1456 = vld [vmem:[%s2 + $0x18] sm:$0xff]
        %v1457 = vld [vmem:[%s2 + $0x20] sm:$0xff]
        %v1458 = vld [vmem:[%s2 + $0x28] sm:$0xff]
        %v1459 = vld [vmem:[%s2 + $0x30] sm:$0xff]
        %v1460 = vld [vmem:[%s2 + $0x38] sm:$0xff]
        %1462 = vset.pattern.permute.xlu0 0
        %1463 = vperm.xlu0 %1462, %v1453
        %v1464 = vpop.permute.xlu0 %1463
        %1467 = vset.pattern.permute.xlu0 0
        %1468 = vperm.xlu0 %1467, %v1454
        %v1469 = vpop.permute.xlu0 %1468
        %1472 = vset.pattern.permute.xlu0 0
        %1473 = vperm.xlu0 %1472, %v1455
        %v1474 = vpop.permute.xlu0 %1473
        %1477 = vset.pattern.permute.xlu0 0
        %1478 = vperm.xlu0 %1477, %v1456
        %v1479 = vpop.permute.xlu0 %1478
        %1482 = vset.pattern.permute.xlu0 0
        %1483 = vperm.xlu0 %1482, %v1457
        %v1484 = vpop.permute.xlu0 %1483
        %1487 = vset.pattern.permute.xlu0 0
        %1488 = vperm.xlu0 %1487, %v1458
        %v1489 = vpop.permute.xlu0 %1488
        %1492 = vset.pattern.permute.xlu0 0
        %1493 = vperm.xlu0 %1492, %v1459
        %v1494 = vpop.permute.xlu0 %1493
        %1497 = vset.pattern.permute.xlu0 0
        %1498 = vperm.xlu0 %1497, %v1460
        %v1499 = vpop.permute.xlu0 %1498
        %v1525 = vunpack.c.l.b16 %v1357
        %v1526 = vunpack.c.h.b16 %v1357
        %v1527 = vunpack.c.l.b16 %v1358
        %v1528 = vunpack.c.h.b16 %v1358
        %v1529 = vunpack.c.l.b16 %v1359
        %v1530 = vunpack.c.l.b16 %v1360
        %v1531 = vunpack.c.h.b16 %v1360
        %v1532 = vunpack.c.l.b16 %v1361
        %v1533 = vunpack.c.h.b16 %v1361
        %v1534 = vunpack.c.l.b16 %v1362
        %v1535 = vunpack.c.l.b16 %v1363
        %v1536 = vunpack.c.h.b16 %v1363
        %v1537 = vunpack.c.l.b16 %v1364
        %v1538 = vunpack.c.h.b16 %v1364
        %v1539 = vunpack.c.l.b16 %v1365
        %v1540 = vunpack.c.l.b16 %v1366
        %v1541 = vunpack.c.h.b16 %v1366
        %v1542 = vunpack.c.l.b16 %v1367
        %v1543 = vunpack.c.h.b16 %v1367
        %v1544 = vunpack.c.l.b16 %v1368
        %v1545 = vunpack.c.l.b16 %v1369
        %v1546 = vunpack.c.h.b16 %v1369
        %v1547 = vunpack.c.l.b16 %v1370
        %v1548 = vunpack.c.h.b16 %v1370
        %v1549 = vunpack.c.l.b16 %v1371
        %v1550 = vunpack.c.l.b16 %v1372
        %v1551 = vunpack.c.h.b16 %v1372
        %v1552 = vunpack.c.l.b16 %v1373
        %v1553 = vunpack.c.h.b16 %v1373
        %v1554 = vunpack.c.l.b16 %v1374
        %v1555 = vunpack.c.l.b16 %v1375
        %v1556 = vunpack.c.h.b16 %v1375
        %v1557 = vunpack.c.l.b16 %v1376
        %v1558 = vunpack.c.h.b16 %v1376
        %v1559 = vunpack.c.l.b16 %v1377
        %v1560 = vunpack.c.l.b16 %v1378
        %v1561 = vunpack.c.h.b16 %v1378
        %v1562 = vunpack.c.l.b16 %v1379
        %v1563 = vunpack.c.h.b16 %v1379
        %v1564 = vunpack.c.l.b16 %v1380
        %v1565 = vpack.c.b16 %v1530, %v1525
        %v1566 = vpack.c.b16 %v1531, %v1526
        %v1567 = vpack.c.b16 %v1532, %v1527
        %v1568 = vpack.c.b16 %v1533, %v1528
        %v1569 = vpack.c.b16 %v1534, %v1529
        %v1570 = vpack.c.b16 %v1540, %v1535
        %v1571 = vpack.c.b16 %v1541, %v1536
        %v1572 = vpack.c.b16 %v1542, %v1537
        %v1573 = vpack.c.b16 %v1543, %v1538
        %v1574 = vpack.c.b16 %v1544, %v1539
        %v1575 = vpack.c.b16 %v1550, %v1545
        %v1576 = vpack.c.b16 %v1551, %v1546
        %v1577 = vpack.c.b16 %v1552, %v1547
        %v1578 = vpack.c.b16 %v1553, %v1548
        %v1579 = vpack.c.b16 %v1554, %v1549
        %v1580 = vpack.c.b16 %v1560, %v1555
        %v1581 = vpack.c.b16 %v1561, %v1556
        %v1582 = vpack.c.b16 %v1562, %v1557
        %v1583 = vpack.c.b16 %v1563, %v1558
        %v1584 = vpack.c.b16 %v1564, %v1559
        %v1673 = vunpack.c.l.b16 %v1381
        %v1674 = vunpack.c.h.b16 %v1381
        %v1675 = vunpack.c.l.b16 %v1382
        %v1676 = vunpack.c.h.b16 %v1382
        %v1677 = vunpack.c.l.b16 %v1383
        %v1678 = vunpack.c.h.b16 %v1383
        %v1679 = vunpack.c.l.b16 %v1384
        %v1680 = vunpack.c.h.b16 %v1384
        %v1681 = vunpack.c.l.b16 %v1385
        %v1682 = vunpack.c.h.b16 %v1385
        %v1683 = vunpack.c.l.b16 %v1386
        %v1684 = vunpack.c.h.b16 %v1386
        %v1685 = vunpack.c.l.b16 %v1387
        %v1686 = vunpack.c.h.b16 %v1387
        %v1687 = vunpack.c.l.b16 %v1388
        %v1688 = vunpack.c.h.b16 %v1388
        %v1689 = vunpack.c.l.b16 %v1389
        %v1690 = vunpack.c.h.b16 %v1389
        %v1691 = vunpack.c.l.b16 %v1390
        %v1692 = vunpack.c.h.b16 %v1390
        %v1693 = vunpack.c.l.b16 %v1391
        %v1694 = vunpack.c.h.b16 %v1391
        %v1695 = vunpack.c.l.b16 %v1392
        %v1696 = vunpack.c.h.b16 %v1392
        %v1697 = vunpack.c.l.b16 %v1393
        %v1698 = vunpack.c.h.b16 %v1393
        %v1699 = vunpack.c.l.b16 %v1394
        %v1700 = vunpack.c.h.b16 %v1394
        %v1701 = vunpack.c.l.b16 %v1395
        %v1702 = vunpack.c.h.b16 %v1395
        %v1703 = vunpack.c.l.b16 %v1396
        %v1704 = vunpack.c.h.b16 %v1396
        %v1705 = vunpack.c.l.b16 %v1397
        %v1706 = vunpack.c.h.b16 %v1397
        %v1707 = vunpack.c.l.b16 %v1398
        %v1708 = vunpack.c.h.b16 %v1398
        %v1709 = vunpack.c.l.b16 %v1399
        %v1710 = vunpack.c.h.b16 %v1399
        %v1711 = vunpack.c.l.b16 %v1400
        %v1712 = vunpack.c.h.b16 %v1400
        %v1713 = vunpack.c.l.b16 %v1401
        %v1714 = vunpack.c.h.b16 %v1401
        %v1715 = vunpack.c.l.b16 %v1402
        %v1716 = vunpack.c.h.b16 %v1402
        %v1717 = vunpack.c.l.b16 %v1403
        %v1718 = vunpack.c.h.b16 %v1403
        %v1719 = vunpack.c.l.b16 %v1404
        %v1720 = vunpack.c.h.b16 %v1404
        %v1721 = vunpack.c.l.b16 %v1405
        %v1722 = vunpack.c.h.b16 %v1405
        %v1723 = vunpack.c.l.b16 %v1406
        %v1724 = vunpack.c.h.b16 %v1406
        %v1725 = vunpack.c.l.b16 %v1407
        %v1726 = vunpack.c.h.b16 %v1407
        %v1727 = vunpack.c.l.b16 %v1408
        %v1728 = vunpack.c.h.b16 %v1408
        %v1729 = vunpack.c.l.b16 %v1409
        %v1730 = vunpack.c.h.b16 %v1409
        %v1731 = vunpack.c.l.b16 %v1410
        %v1732 = vunpack.c.h.b16 %v1410
        %v1733 = vunpack.c.l.b16 %v1411
        %v1734 = vunpack.c.h.b16 %v1411
        %v1735 = vunpack.c.l.b16 %v1412
        %v1736 = vunpack.c.h.b16 %v1412
        %v1737 = vunpack.c.l.b16 %v1413
        %v1738 = vunpack.c.h.b16 %v1413
        %v1739 = vunpack.c.l.b16 %v1414
        %v1740 = vunpack.c.h.b16 %v1414
        %v1741 = vunpack.c.l.b16 %v1415
        %v1742 = vunpack.c.h.b16 %v1415
        %v1743 = vunpack.c.l.b16 %v1416
        %v1744 = vunpack.c.h.b16 %v1416
        %v1745 = vunpack.c.l.b16 %v1417
        %v1746 = vunpack.c.h.b16 %v1417
        %v1747 = vunpack.c.l.b16 %v1418
        %v1748 = vunpack.c.h.b16 %v1418
        %v1749 = vunpack.c.l.b16 %v1419
        %v1750 = vunpack.c.h.b16 %v1419
        %v1751 = vunpack.c.l.b16 %v1420
        %v1752 = vunpack.c.h.b16 %v1420
        %v1753 = vunpack.c.l.b16 %v1421
        %v1754 = vunpack.c.h.b16 %v1421
        %v1755 = vunpack.c.l.b16 %v1422
        %v1756 = vunpack.c.h.b16 %v1422
        %v1757 = vunpack.c.l.b16 %v1423
        %v1758 = vunpack.c.h.b16 %v1423
        %v1759 = vunpack.c.l.b16 %v1424
        %v1760 = vunpack.c.h.b16 %v1424
        %v1761 = vunpack.c.l.b16 %v1425
        %v1762 = vunpack.c.h.b16 %v1425
        %v1763 = vunpack.c.l.b16 %v1426
        %v1764 = vunpack.c.h.b16 %v1426
        %v1765 = vunpack.c.l.b16 %v1427
        %v1766 = vunpack.c.h.b16 %v1427
        %v1767 = vunpack.c.l.b16 %v1428
        %v1768 = vunpack.c.h.b16 %v1428
        %v1769 = vunpack.c.l.b16 %v1429
        %v1770 = vunpack.c.h.b16 %v1429
        %v1771 = vunpack.c.l.b16 %v1430
        %v1772 = vunpack.c.h.b16 %v1430
        %v1773 = vunpack.c.l.b16 %v1431
        %v1774 = vunpack.c.h.b16 %v1431
        %v1775 = vunpack.c.l.b16 %v1432
        %v1776 = vunpack.c.h.b16 %v1432
        %v1777 = vunpack.c.l.b16 %v1433
        %v1778 = vunpack.c.h.b16 %v1433
        %v1779 = vunpack.c.l.b16 %v1434
        %v1780 = vunpack.c.h.b16 %v1434
        %v1781 = vunpack.c.l.b16 %v1435
        %v1782 = vunpack.c.h.b16 %v1435
        %v1783 = vunpack.c.l.b16 %v1436
        %v1784 = vunpack.c.h.b16 %v1436
        %v1785 = vunpack.c.l.b16 %v1437
        %v1786 = vunpack.c.h.b16 %v1437
        %v1787 = vunpack.c.l.b16 %v1438
        %v1788 = vunpack.c.h.b16 %v1438
        %v1789 = vunpack.c.l.b16 %v1439
        %v1790 = vunpack.c.h.b16 %v1439
        %v1791 = vunpack.c.l.b16 %v1440
        %v1792 = vunpack.c.h.b16 %v1440
        %v1793 = vunpack.c.l.b16 %v1441
        %v1794 = vunpack.c.h.b16 %v1441
        %v1795 = vunpack.c.l.b16 %v1442
        %v1796 = vunpack.c.h.b16 %v1442
        %v1797 = vunpack.c.l.b16 %v1443
        %v1798 = vunpack.c.h.b16 %v1443
        %v1799 = vunpack.c.l.b16 %v1444
        %v1800 = vunpack.c.h.b16 %v1444
        %v1801 = vunpack.c.l.b16 %v1445
        %v1802 = vunpack.c.h.b16 %v1445
        %v1803 = vunpack.c.l.b16 %v1446
        %v1804 = vunpack.c.h.b16 %v1446
        %v1805 = vunpack.c.l.b16 %v1447
        %v1806 = vunpack.c.h.b16 %v1447
        %v1807 = vunpack.c.l.b16 %v1448
        %v1808 = vunpack.c.h.b16 %v1448
        %v1809 = vunpack.c.l.b16 %v1449
        %v1810 = vunpack.c.h.b16 %v1449
        %v1811 = vunpack.c.l.b16 %v1450
        %v1812 = vunpack.c.h.b16 %v1450
        %v1813 = vunpack.c.l.b16 %v1451
        %v1814 = vunpack.c.h.b16 %v1451
        %v1815 = vunpack.c.l.b16 %v1452
        %v1816 = vunpack.c.h.b16 %v1452
        %v1817 = vpack.c.b16 %v1675, %v1673
        %v1818 = vpack.c.b16 %v1676, %v1674
        %v1819 = vpack.c.b16 %v1679, %v1677
        %v1820 = vpack.c.b16 %v1680, %v1678
        %v1821 = vpack.c.b16 %v1683, %v1681
        %v1822 = vpack.c.b16 %v1684, %v1682
        %v1823 = vpack.c.b16 %v1687, %v1685
        %v1824 = vpack.c.b16 %v1688, %v1686
        %v1825 = vpack.c.b16 %v1691, %v1689
        %v1826 = vpack.c.b16 %v1692, %v1690
        %v1827 = vpack.c.b16 %v1695, %v1693
        %v1828 = vpack.c.b16 %v1696, %v1694
        %v1829 = vpack.c.b16 %v1699, %v1697
        %v1830 = vpack.c.b16 %v1700, %v1698
        %v1831 = vpack.c.b16 %v1703, %v1701
        %v1832 = vpack.c.b16 %v1704, %v1702
        %v1833 = vpack.c.b16 %v1707, %v1705
        %v1834 = vpack.c.b16 %v1708, %v1706
        %v1835 = vpack.c.b16 %v1711, %v1709
        %v1836 = vpack.c.b16 %v1712, %v1710
        %v1837 = vpack.c.b16 %v1715, %v1713
        %v1838 = vpack.c.b16 %v1716, %v1714
        %v1839 = vpack.c.b16 %v1719, %v1717
        %v1840 = vpack.c.b16 %v1720, %v1718
        %v1841 = vpack.c.b16 %v1723, %v1721
        %v1842 = vpack.c.b16 %v1724, %v1722
        %v1843 = vpack.c.b16 %v1727, %v1725
        %v1844 = vpack.c.b16 %v1728, %v1726
        %v1845 = vpack.c.b16 %v1731, %v1729
        %v1846 = vpack.c.b16 %v1732, %v1730
        %v1847 = vpack.c.b16 %v1735, %v1733
        %v1848 = vpack.c.b16 %v1736, %v1734
        %v1849 = vpack.c.b16 %v1739, %v1737
        %v1850 = vpack.c.b16 %v1740, %v1738
        %v1851 = vpack.c.b16 %v1743, %v1741
        %v1852 = vpack.c.b16 %v1744, %v1742
        %v1853 = vpack.c.b16 %v1747, %v1745
        %v1854 = vpack.c.b16 %v1748, %v1746
        %v1855 = vpack.c.b16 %v1751, %v1749
        %v1856 = vpack.c.b16 %v1752, %v1750
        %v1857 = vpack.c.b16 %v1755, %v1753
        %v1858 = vpack.c.b16 %v1756, %v1754
        %v1859 = vpack.c.b16 %v1759, %v1757
        %v1860 = vpack.c.b16 %v1760, %v1758
        %v1861 = vpack.c.b16 %v1763, %v1761
        %v1862 = vpack.c.b16 %v1764, %v1762
        %v1863 = vpack.c.b16 %v1767, %v1765
        %v1864 = vpack.c.b16 %v1768, %v1766
        %v1865 = vpack.c.b16 %v1771, %v1769
        %v1866 = vpack.c.b16 %v1772, %v1770
        %v1867 = vpack.c.b16 %v1775, %v1773
        %v1868 = vpack.c.b16 %v1776, %v1774
        %v1869 = vpack.c.b16 %v1779, %v1777
        %v1870 = vpack.c.b16 %v1780, %v1778
        %v1871 = vpack.c.b16 %v1783, %v1781
        %v1872 = vpack.c.b16 %v1784, %v1782
        %v1873 = vpack.c.b16 %v1787, %v1785
        %v1874 = vpack.c.b16 %v1788, %v1786
        %v1875 = vpack.c.b16 %v1791, %v1789
        %v1876 = vpack.c.b16 %v1792, %v1790
        %v1877 = vpack.c.b16 %v1795, %v1793
        %v1878 = vpack.c.b16 %v1796, %v1794
        %v1879 = vpack.c.b16 %v1799, %v1797
        %v1880 = vpack.c.b16 %v1800, %v1798
        %v1881 = vpack.c.b16 %v1803, %v1801
        %v1882 = vpack.c.b16 %v1804, %v1802
        %v1883 = vpack.c.b16 %v1807, %v1805
        %v1884 = vpack.c.b16 %v1808, %v1806
        %v1885 = vpack.c.b16 %v1811, %v1809
        %v1886 = vpack.c.b16 %v1812, %v1810
        %v1887 = vpack.c.b16 %v1815, %v1813
        %v1888 = vpack.c.b16 %v1816, %v1814
        %vm1961 = vcmask 523264
        %v1963 = vsel %vm1961, %v1569, 0
        %v1966 = vsel %vm1961, %v1574, 0
        %v1969 = vsel %vm1961, %v1579, 0
        %v1972 = vsel %vm1961, %v1584, 0
        %1974 = vmatpush.bf16.msra.mxu0 %v1831
        %1975 = vmatpush.bf16.msra.mxu0 %v1829
        %1976 = vmatpush.bf16.msra.mxu0 %v1827
        %1977 = vmatpush.bf16.msra.mxu0 %v1825
        %1978 = vmatpush.bf16.msra.mxu0 %v1823
        %1979 = vmatpush.bf16.msra.mxu0 %v1821
        %1980 = vmatpush.bf16.msra.mxu0 %v1819
        %1981 = vmatpush.bf16.msra.mxu0 %v1817
        %1982 = vmatmul.bf16.gmra.mxu0 %v1565
        %v1983 = vpop.f32.mrf.mxu0
        %v1984 = vadd.f32 %v1464, %v1983
        %v1985 = vpop.f32.mrf.mxu0
        %v1986 = vadd.f32 %v1469, %v1985
        %1987 = vmatmul.bf16.gmra.mxu0 %v1570
        %v1988 = vpop.f32.mrf.mxu0
        %v1989 = vadd.f32 %v1474, %v1988
        %v1990 = vpop.f32.mrf.mxu0
        %v1991 = vadd.f32 %v1479, %v1990
        %1992 = vmatmul.bf16.gmra.mxu0 %v1575
        %v1993 = vpop.f32.mrf.mxu0
        %v1994 = vadd.f32 %v1484, %v1993
        %v1995 = vpop.f32.mrf.mxu0
        %v1996 = vadd.f32 %v1489, %v1995
        %1997 = vmatmul.bf16.gmra.mxu0 %v1580
        %v1998 = vpop.f32.mrf.mxu0
        %v1999 = vadd.f32 %v1494, %v1998
        %v2000 = vpop.f32.mrf.mxu0
        %v2001 = vadd.f32 %v1499, %v2000
        %2002 = vdwg.mxu0
        %2003 = vmatpush.bf16.msra.mxu0 %v1847
        %2004 = vmatpush.bf16.msra.mxu0 %v1845
        %2005 = vmatpush.bf16.msra.mxu0 %v1843
        %2006 = vmatpush.bf16.msra.mxu0 %v1841
        %2007 = vmatpush.bf16.msra.mxu0 %v1839
        %2008 = vmatpush.bf16.msra.mxu0 %v1837
        %2009 = vmatpush.bf16.msra.mxu0 %v1835
        %2010 = vmatpush.bf16.msra.mxu0 %v1833
        %2011 = vmatmul.bf16.gmra.mxu0 %v1566
        %v2012 = vpop.f32.mrf.mxu0
        %v2013 = vadd.f32 %v1984, %v2012
        %v2014 = vpop.f32.mrf.mxu0
        %v2015 = vadd.f32 %v1986, %v2014
        %2016 = vmatmul.bf16.gmra.mxu0 %v1571
        %v2017 = vpop.f32.mrf.mxu0
        %v2018 = vadd.f32 %v1989, %v2017
        %v2019 = vpop.f32.mrf.mxu0
        %v2020 = vadd.f32 %v1991, %v2019
        %2021 = vmatmul.bf16.gmra.mxu0 %v1576
        %v2022 = vpop.f32.mrf.mxu0
        %v2023 = vadd.f32 %v1994, %v2022
        %v2024 = vpop.f32.mrf.mxu0
        %v2025 = vadd.f32 %v1996, %v2024
        %2026 = vmatmul.bf16.gmra.mxu0 %v1581
        %v2027 = vpop.f32.mrf.mxu0
        %v2028 = vadd.f32 %v1999, %v2027
        %v2029 = vpop.f32.mrf.mxu0
        %v2030 = vadd.f32 %v2001, %v2029
        %2031 = vdwg.mxu0
        %2032 = vmatpush.bf16.msra.mxu0 %v1863
        %2033 = vmatpush.bf16.msra.mxu0 %v1861
        %2034 = vmatpush.bf16.msra.mxu0 %v1859
        %2035 = vmatpush.bf16.msra.mxu0 %v1857
        %2036 = vmatpush.bf16.msra.mxu0 %v1855
        %2037 = vmatpush.bf16.msra.mxu0 %v1853
        %2038 = vmatpush.bf16.msra.mxu0 %v1851
        %2039 = vmatpush.bf16.msra.mxu0 %v1849
        %2040 = vmatmul.bf16.gmra.mxu0 %v1567
        %v2041 = vpop.f32.mrf.mxu0
        %v2042 = vadd.f32 %v2013, %v2041
        %v2043 = vpop.f32.mrf.mxu0
        %v2044 = vadd.f32 %v2015, %v2043
        %2045 = vmatmul.bf16.gmra.mxu0 %v1572
        %v2046 = vpop.f32.mrf.mxu0
        %v2047 = vadd.f32 %v2018, %v2046
        %v2048 = vpop.f32.mrf.mxu0
        %v2049 = vadd.f32 %v2020, %v2048
        %2050 = vmatmul.bf16.gmra.mxu0 %v1577
        %v2051 = vpop.f32.mrf.mxu0
        %v2052 = vadd.f32 %v2023, %v2051
        %v2053 = vpop.f32.mrf.mxu0
        %v2054 = vadd.f32 %v2025, %v2053
        %2055 = vmatmul.bf16.gmra.mxu0 %v1582
        %v2056 = vpop.f32.mrf.mxu0
        %v2057 = vadd.f32 %v2028, %v2056
        %v2058 = vpop.f32.mrf.mxu0
        %v2059 = vadd.f32 %v2030, %v2058
        %2060 = vdwg.mxu0
        %2061 = vmatpush.bf16.msra.mxu0 %v1879
        %2062 = vmatpush.bf16.msra.mxu0 %v1877
        %2063 = vmatpush.bf16.msra.mxu0 %v1875
        %2064 = vmatpush.bf16.msra.mxu0 %v1873
        %2065 = vmatpush.bf16.msra.mxu0 %v1871
        %2066 = vmatpush.bf16.msra.mxu0 %v1869
        %2067 = vmatpush.bf16.msra.mxu0 %v1867
        %2068 = vmatpush.bf16.msra.mxu0 %v1865
        %2069 = vmatmul.bf16.gmra.mxu0 %v1568
        %v2070 = vpop.f32.mrf.mxu0
        %v2071 = vadd.f32 %v2042, %v2070
        %v2072 = vpop.f32.mrf.mxu0
        %v2073 = vadd.f32 %v2044, %v2072
        %2074 = vmatmul.bf16.gmra.mxu0 %v1573
        %v2075 = vpop.f32.mrf.mxu0
        %v2076 = vadd.f32 %v2047, %v2075
        %v2077 = vpop.f32.mrf.mxu0
        %v2078 = vadd.f32 %v2049, %v2077
        %2079 = vmatmul.bf16.gmra.mxu0 %v1578
        %v2080 = vpop.f32.mrf.mxu0
        %v2081 = vadd.f32 %v2052, %v2080
        %v2082 = vpop.f32.mrf.mxu0
        %v2083 = vadd.f32 %v2054, %v2082
        %2084 = vmatmul.bf16.gmra.mxu0 %v1583
        %v2085 = vpop.f32.mrf.mxu0
        %v2086 = vadd.f32 %v2057, %v2085
        %v2087 = vpop.f32.mrf.mxu0
        %v2088 = vadd.f32 %v2059, %v2087
        %2089 = vdwg.mxu0
        %2090 = vmatpush.bf16.msra.mxu0 0
        %2091 = vmatpush.bf16.msra.mxu0 0
        %2092 = vmatpush.bf16.msra.mxu0 0
        %2093 = vmatpush.bf16.msra.mxu0 0
        %2094 = vmatpush.bf16.msra.mxu0 %v1887
        %2095 = vmatpush.bf16.msra.mxu0 %v1885
        %2096 = vmatpush.bf16.msra.mxu0 %v1883
        %2097 = vmatpush.bf16.msra.mxu0 %v1881
        %2098 = vmatmul.bf16.gmra.mxu0 %v1963
        %v2099 = vpop.f32.mrf.mxu0
        %v2100 = vadd.f32 %v2071, %v2099
        %v2101 = vpop.f32.mrf.mxu0
        %v2102 = vadd.f32 %v2073, %v2101
        %2103 = vmatmul.bf16.gmra.mxu0 %v1966
        %v2104 = vpop.f32.mrf.mxu0
        %v2105 = vadd.f32 %v2076, %v2104
        %v2106 = vpop.f32.mrf.mxu0
        %v2107 = vadd.f32 %v2078, %v2106
        %2108 = vmatmul.bf16.gmra.mxu0 %v1969
        %v2109 = vpop.f32.mrf.mxu0
        %v2110 = vadd.f32 %v2081, %v2109
        %v2111 = vpop.f32.mrf.mxu0
        %v2112 = vadd.f32 %v2083, %v2111
        %2113 = vmatmul.bf16.gmra.mxu0 %v1972
        %v2114 = vpop.f32.mrf.mxu0
        %v2115 = vadd.f32 %v2086, %v2114
        %v2116 = vpop.f32.mrf.mxu0
        %v2117 = vadd.f32 %v2088, %v2116
        %2118 = vdwg.mxu0
        %2119 = vmatpush.bf16.msra.mxu0 %v1832
        %2120 = vmatpush.bf16.msra.mxu0 %v1830
        %2121 = vmatpush.bf16.msra.mxu0 %v1828
        %2122 = vmatpush.bf16.msra.mxu0 %v1826
        %2123 = vmatpush.bf16.msra.mxu0 %v1824
        %2124 = vmatpush.bf16.msra.mxu0 %v1822
        %2125 = vmatpush.bf16.msra.mxu0 %v1820
        %2126 = vmatpush.bf16.msra.mxu0 %v1818
        %2127 = vmatmul.bf16.gmra.mxu0 %v1565
        %v2128 = vpop.f32.mrf.mxu0
        %v2129 = vadd.f32 %v1464, %v2128
        %v2130 = vpop.f32.mrf.mxu0
        %v2131 = vadd.f32 %v1469, %v2130
        %2132 = vmatmul.bf16.gmra.mxu0 %v1570
        %v2133 = vpop.f32.mrf.mxu0
        %v2134 = vadd.f32 %v1474, %v2133
        %v2135 = vpop.f32.mrf.mxu0
        %v2136 = vadd.f32 %v1479, %v2135
        %2137 = vmatmul.bf16.gmra.mxu0 %v1575
        %v2138 = vpop.f32.mrf.mxu0
        %v2139 = vadd.f32 %v1484, %v2138
        %v2140 = vpop.f32.mrf.mxu0
        %v2141 = vadd.f32 %v1489, %v2140
        %2142 = vmatmul.bf16.gmra.mxu0 %v1580
        %v2143 = vpop.f32.mrf.mxu0
        %v2144 = vadd.f32 %v1494, %v2143
        %v2145 = vpop.f32.mrf.mxu0
        %v2146 = vadd.f32 %v1499, %v2145
        %2147 = vdwg.mxu0
        %2148 = vmatpush.bf16.msra.mxu0 %v1848
        %2149 = vmatpush.bf16.msra.mxu0 %v1846
        %2150 = vmatpush.bf16.msra.mxu0 %v1844
        %2151 = vmatpush.bf16.msra.mxu0 %v1842
        %2152 = vmatpush.bf16.msra.mxu0 %v1840
        %2153 = vmatpush.bf16.msra.mxu0 %v1838
        %2154 = vmatpush.bf16.msra.mxu0 %v1836
        %2155 = vmatpush.bf16.msra.mxu0 %v1834
        %2156 = vmatmul.bf16.gmra.mxu0 %v1566
        %v2157 = vpop.f32.mrf.mxu0
        %v2158 = vadd.f32 %v2129, %v2157
        %v2159 = vpop.f32.mrf.mxu0
        %v2160 = vadd.f32 %v2131, %v2159
        %2161 = vmatmul.bf16.gmra.mxu0 %v1571
        %v2162 = vpop.f32.mrf.mxu0
        %v2163 = vadd.f32 %v2134, %v2162
        %v2164 = vpop.f32.mrf.mxu0
        %v2165 = vadd.f32 %v2136, %v2164
        %2166 = vmatmul.bf16.gmra.mxu0 %v1576
        %v2167 = vpop.f32.mrf.mxu0
        %v2168 = vadd.f32 %v2139, %v2167
        %v2169 = vpop.f32.mrf.mxu0
        %v2170 = vadd.f32 %v2141, %v2169
        %2171 = vmatmul.bf16.gmra.mxu0 %v1581
        %v2172 = vpop.f32.mrf.mxu0
        %v2173 = vadd.f32 %v2144, %v2172
        %v2174 = vpop.f32.mrf.mxu0
        %v2175 = vadd.f32 %v2146, %v2174
        %2176 = vdwg.mxu0
        %2177 = vmatpush.bf16.msra.mxu0 %v1864
        %2178 = vmatpush.bf16.msra.mxu0 %v1862
        %2179 = vmatpush.bf16.msra.mxu0 %v1860
        %2180 = vmatpush.bf16.msra.mxu0 %v1858
        %2181 = vmatpush.bf16.msra.mxu0 %v1856
        %2182 = vmatpush.bf16.msra.mxu0 %v1854
        %2183 = vmatpush.bf16.msra.mxu0 %v1852
        %2184 = vmatpush.bf16.msra.mxu0 %v1850
        %2185 = vmatmul.bf16.gmra.mxu0 %v1567
        %v2186 = vpop.f32.mrf.mxu0
        %v2187 = vadd.f32 %v2158, %v2186
        %v2188 = vpop.f32.mrf.mxu0
        %v2189 = vadd.f32 %v2160, %v2188
        %2190 = vmatmul.bf16.gmra.mxu0 %v1572
        %v2191 = vpop.f32.mrf.mxu0
        %v2192 = vadd.f32 %v2163, %v2191
        %v2193 = vpop.f32.mrf.mxu0
        %v2194 = vadd.f32 %v2165, %v2193
        %2195 = vmatmul.bf16.gmra.mxu0 %v1577
        %v2196 = vpop.f32.mrf.mxu0
        %v2197 = vadd.f32 %v2168, %v2196
        %v2198 = vpop.f32.mrf.mxu0
        %v2199 = vadd.f32 %v2170, %v2198
        %2200 = vmatmul.bf16.gmra.mxu0 %v1582
        %v2201 = vpop.f32.mrf.mxu0
        %v2202 = vadd.f32 %v2173, %v2201
        %v2203 = vpop.f32.mrf.mxu0
        %v2204 = vadd.f32 %v2175, %v2203
        %2205 = vdwg.mxu0
        %2206 = vmatpush.bf16.msra.mxu0 %v1880
        %2207 = vmatpush.bf16.msra.mxu0 %v1878
        %2208 = vmatpush.bf16.msra.mxu0 %v1876
        %2209 = vmatpush.bf16.msra.mxu0 %v1874
        %2210 = vmatpush.bf16.msra.mxu0 %v1872
        %2211 = vmatpush.bf16.msra.mxu0 %v1870
        %2212 = vmatpush.bf16.msra.mxu0 %v1868
        %2213 = vmatpush.bf16.msra.mxu0 %v1866
        %2214 = vmatmul.bf16.gmra.mxu0 %v1568
        %v2215 = vpop.f32.mrf.mxu0
        %v2216 = vadd.f32 %v2187, %v2215
        %v2217 = vpop.f32.mrf.mxu0
        %v2218 = vadd.f32 %v2189, %v2217
        %2219 = vmatmul.bf16.gmra.mxu0 %v1573
        %v2220 = vpop.f32.mrf.mxu0
        %v2221 = vadd.f32 %v2192, %v2220
        %v2222 = vpop.f32.mrf.mxu0
        %v2223 = vadd.f32 %v2194, %v2222
        %2224 = vmatmul.bf16.gmra.mxu0 %v1578
        %v2225 = vpop.f32.mrf.mxu0
        %v2226 = vadd.f32 %v2197, %v2225
        %v2227 = vpop.f32.mrf.mxu0
        %v2228 = vadd.f32 %v2199, %v2227
        %2229 = vmatmul.bf16.gmra.mxu0 %v1583
        %v2230 = vpop.f32.mrf.mxu0
        %v2231 = vadd.f32 %v2202, %v2230
        %v2232 = vpop.f32.mrf.mxu0
        %v2233 = vadd.f32 %v2204, %v2232
        %2234 = vdwg.mxu0
        %2235 = vmatpush.bf16.msra.mxu0 0
        %2236 = vmatpush.bf16.msra.mxu0 0
        %2237 = vmatpush.bf16.msra.mxu0 0
        %2238 = vmatpush.bf16.msra.mxu0 0
        %2239 = vmatpush.bf16.msra.mxu0 %v1888
        %2240 = vmatpush.bf16.msra.mxu0 %v1886
        %2241 = vmatpush.bf16.msra.mxu0 %v1884
        %2242 = vmatpush.bf16.msra.mxu0 %v1882
        %2243 = vmatmul.bf16.gmra.mxu0 %v1963
        %v2244 = vpop.f32.mrf.mxu0
        %v2245 = vadd.f32 %v2216, %v2244
        %v2246 = vpop.f32.mrf.mxu0
        %v2247 = vadd.f32 %v2218, %v2246
        %2248 = vmatmul.bf16.gmra.mxu0 %v1966
        %v2249 = vpop.f32.mrf.mxu0
        %v2250 = vadd.f32 %v2221, %v2249
        %v2251 = vpop.f32.mrf.mxu0
        %v2252 = vadd.f32 %v2223, %v2251
        %2253 = vmatmul.bf16.gmra.mxu0 %v1969
        %v2254 = vpop.f32.mrf.mxu0
        %v2255 = vadd.f32 %v2226, %v2254
        %v2256 = vpop.f32.mrf.mxu0
        %v2257 = vadd.f32 %v2228, %v2256
        %2258 = vmatmul.bf16.gmra.mxu0 %v1972
        %v2259 = vpop.f32.mrf.mxu0
        %v2260 = vadd.f32 %v2231, %v2259
        %v2261 = vpop.f32.mrf.mxu0
        %v2262 = vadd.f32 %v2233, %v2261
        %2263 = vdwg.mxu0
        %v2264 = vmax.f32 %v2100, 0.0
        %v2265 = vmax.f32 %v2245, 0.0
        %v2266 = vmax.f32 %v2102, 0.0
        %v2267 = vmax.f32 %v2247, 0.0
        %v2268 = vmax.f32 %v2105, 0.0
        %v2269 = vmax.f32 %v2250, 0.0
        %v2270 = vmax.f32 %v2107, 0.0
        %v2271 = vmax.f32 %v2252, 0.0
        %v2272 = vmax.f32 %v2110, 0.0
        %v2273 = vmax.f32 %v2255, 0.0
        %v2274 = vmax.f32 %v2112, 0.0
        %v2275 = vmax.f32 %v2257, 0.0
        %v2276 = vmax.f32 %v2115, 0.0
        %v2277 = vmax.f32 %v2260, 0.0
        %v2278 = vmax.f32 %v2117, 0.0
        %v2279 = vmax.f32 %v2262, 0.0
        %2280 = vst [vmem:[%s225] sm:$0xff] %v2264
        %2281 = vst [vmem:[%s225 + $0x8] sm:$0xff] %v2265
        %2282 = vst [vmem:[%s225 + $0x10] sm:$0xff] %v2266
        %2283 = vst [vmem:[%s225 + $0x18] sm:$0xff] %v2267
        %2284 = vst [vmem:[%s225 + $0x20] sm:$0xff] %v2268
        %2285 = vst [vmem:[%s225 + $0x28] sm:$0xff] %v2269
        %2286 = vst [vmem:[%s225 + $0x30] sm:$0xff] %v2270
        %2287 = vst [vmem:[%s225 + $0x38] sm:$0xff] %v2271
        %2288 = vst [vmem:[%s225 + $0x40] sm:$0xff] %v2272
        %2289 = vst [vmem:[%s225 + $0x48] sm:$0xff] %v2273
        %2290 = vst [vmem:[%s225 + $0x50] sm:$0xff] %v2274
        %2291 = vst [vmem:[%s225 + $0x58] sm:$0xff] %v2275
        %2292 = vst [vmem:[%s225 + $0x60] sm:$0xff] %v2276
        %2293 = vst [vmem:[%s225 + $0x68] sm:$0xff] %v2277
        %2294 = vst [vmem:[%s225 + $0x70] sm:$0xff] %v2278
        %2295 = vst [vmem:[%s225 + $0x78] sm:$0xff] %v2279
        %s2296 = sand.u32 %s113, 1
        %s2297 = scalar_lea.sflag [#allocation5], %s2296
        %s2298 = sand.u32 %s113, 1
        %s2299 = smul.addr %s2298, 128
        %s2300 = scalar_lea.vmem [#allocation8], %s2299
        // Predicated region
        $region41: #{tpu_custom_call.1} parent=31 // pred_check
          %p2301 = pneg %p123
        $region42: #{tpu_custom_call.1} parent=31 // pred_check_branch
          %2303 = sbr.rel (%p2301) target = $region44
        $region43: #{tpu_custom_call.1} parent=31 // pred_region
          %s2304 = smul.u32 2, %s26
          %2306 = vsyncadd %s2297, 0
          %s2307 = smul.addr %s25, 32
          %s2308 = sadd.s32 %s2304, %s2307
          %s2309 = smul.addr %s2308, 8
          %s2310 = scalar_lea.hbm %s3, %s2309
          %s2311 = sshll.u32 %s2300, 4
          %s2312 = int_to_ptr.vmem [resolvable:$true] %s2311
          %s2313 = sshll.u32 %s2310, 4
          %s2314 = int_to_ptr.hbm [resolvable:$true] %s2313
          %2319 = dma.vmem_to_hbm [thread:$0]  %s2312, 2048, %s2314, %s2297, 256, 512, 16
        $region44: #{tpu_custom_call.1} parent=31 // pred_fallthru
          _
      $region32: #{tpu_custom_call.1} parent=5 // pred_fallthru
        _
      %p2320 = scmp.le.s32.totalorder 2, %s16
      // Predicated region
      $region45: #{tpu_custom_call.1} parent=5 // pred_check
        %p2321 = pneg %p2320
      $region46: #{tpu_custom_call.1} parent=5 // pred_check_branch
        %2323 = sbr.rel (%p2321) target = $region48
      $region47: #{tpu_custom_call.1} parent=5 // pred_region
        %s2324 = ssub.s32 %s16, 2
        // Predicated region
        $region49: #{tpu_custom_call.1} parent=47 // pred_check
          %p2325 = pneg %p129
        $region50: #{tpu_custom_call.1} parent=47 // pred_check_branch
          %2327 = sbr.rel (%p2325) target = $region52
        $region51: #{tpu_custom_call.1} parent=47 // pred_region
          %s2328 = sand.u32 %s114, 1
          %s2329 = scalar_lea.sflag [#allocation5], %s2328
          %s2330 = sand.u32 %s114, 1
          %s2331 = smul.addr %s2330, 128
          %s2332 = scalar_lea.vmem [#allocation8], %s2331
          %2334 = dma.done %s2329, 2048
        $region52: #{tpu_custom_call.1} parent=47 // pred_fallthru
          _
      $region48: #{tpu_custom_call.1} parent=5 // pred_fallthru
        _
    $region6: #{tpu_custom_call.1} parent=1 // loop_footer
      %s20 = sadd.s32 1, %s16
    $region7: #{tpu_custom_call.1} parent=1 // loop_footer_branch
      %15 = sbr.rel target = $region3
    $region8: #{tpu_custom_call.1} parent=1 // loop_exit
      _
    %2335 = vsyncpa [#allocation4], 1
    %s2336 = scalar_lea.sflag [#allocation4], 1
    %2337 = vsyncpa %s2336, 1
    %2338 = vsyncpa [#allocation7], 1
    %2339 = vsyncpa [#allocation5], 1
    %s2340 = scalar_lea.sflag [#allocation5], 1
    %2341 = vsyncpa %s2340, 1

</llo_original>
